<compile_context>
chip_gen: v5e
topology: v5e:2x2
jax: 0.10.0
libtpu: 0.0.40
codegen_flags: <defaults>
</compile_context>

<pallas_src>
import functools

import jax
import jax.numpy as jnp
import numpy as np
from jax import lax
from jax.experimental import pallas as pl
from jax.experimental.pallas import tpu as pltpu


# ------------------------------ fused kernel --------------------------------

def _fused_cnn_lstm_critic_kernel(patches_ref, w2_ref, bconv_ref, wih_ref,
                                  blstm_ref, whh_ref, vw_ref, vb_ref, v_ref,
                                  *, seq_len, hidden, cout):
    """One program = one batch entry's full T-step sequence.

    patches_ref: (1, T, P, HW) f32  im2col patches for this batch entry
    w2_ref:      (Cout, P)     f32  conv weight (PyTorch OIHW flatten)
    bconv_ref:   (Cout, 1)     f32  conv bias
    wih_ref:     (Cout, HW, 4H)f32  LSTM W_ih^T reshaped to fold the flatten
    blstm_ref:   (1, 4H)       f32  b_ih + b_hh
    whh_ref:     (H, 4H)       f32  LSTM W_hh^T
    vw_ref:      (1, H)        f32  critic head weight row
    vb_ref:      (1, 1)        f32  critic head bias
    v_ref:       (1, 1, T)     f32  critic values for this batch entry
    """
    w2 = w2_ref[...]                                             # (Cout, P)
    bconv = bconv_ref[...]                                       # (Cout, 1)

    # Conv2d + ReLU: one small MXU matmul per timestep, kept in the natural
    # (Cout = 8 sublanes, HW lanes) tile layout.
    conv_slabs = []
    for t in range(seq_len):
        pt = patches_ref[0, t]                                   # (P, HW)
        ct = jnp.dot(w2, pt, preferred_element_type=jnp.float32)  # (Cout, HW)
        conv_slabs.append(jnp.maximum(ct + bconv, 0.0))
    conv3 = jnp.stack(conv_slabs, axis=0)                        # (T, Cout, HW)

    # Hoisted LSTM input projection with the Flatten(Cout, Ho, Wo) reorder
    # folded in: xproj = sum_c conv3[:, c, :] @ W_ih^T[c*HW:(c+1)*HW, :].
    xproj = None
    for c in range(cout):
        wc = wih_ref[c]                                          # (HW, 4H)
        term = jnp.dot(conv3[:, c, :], wc,
                       preferred_element_type=jnp.float32)       # (T, 4H)
        xproj = term if xproj is None else xproj + term
    xproj = xproj + blstm_ref[...]                               # (T, 4H)

    whh = whh_ref[...]                                           # (H, 4H)
    vw = vw_ref[...]                                             # (1, H)

    h = jnp.zeros((1, hidden), jnp.float32)
    c_state = jnp.zeros((1, hidden), jnp.float32)
    vals = []
    # Static unroll over the small fixed sequence length; h/c live in vregs.
    for t in range(seq_len):
        gates = xproj[t:t + 1, :] + jnp.dot(
            h, whh, preferred_element_type=jnp.float32)          # (1, 4H)
        # Whole-vreg transcendentals (EUP slot), then static gate extracts.
        sg = jax.nn.sigmoid(gates)
        th = jnp.tanh(gates)
        i_g = sg[:, 0 * hidden:1 * hidden]       # PyTorch gate order i,f,g,o
        f_g = sg[:, 1 * hidden:2 * hidden]
        g_g = th[:, 2 * hidden:3 * hidden]
        o_g = sg[:, 3 * hidden:4 * hidden]
        c_state = f_g * c_state + i_g * g_g
        h = o_g * jnp.tanh(c_state)
        # Fused critic head: per-step VPU multiply + lane reduce (no concat
        # of hidden states, no separate head kernel / HBM round trip).
        vals.append(jnp.sum(h * vw, axis=-1, keepdims=True))     # (1, 1)

    v_ref[0] = jnp.concatenate(vals, axis=1) + vb_ref[...]       # (1, T)


def fused_forward_pallas(patches4, params, *, seq_len, hidden, cout):
    B = patches4.shape[0]
    T, P, HW = patches4.shape[1], patches4.shape[2], patches4.shape[3]
    h4 = 4 * hidden
    kernel = functools.partial(_fused_cnn_lstm_critic_kernel,
                               seq_len=seq_len, hidden=hidden, cout=cout)
    out = pl.pallas_call(
        kernel,
        out_shape=jax.ShapeDtypeStruct((B, 1, T), jnp.float32),
        grid=(B,),
        in_specs=[
            pl.BlockSpec((1, T, P, HW), lambda b: (b, 0, 0, 0)),   # patches
            pl.BlockSpec((cout, P), lambda b: (0, 0)),             # conv W
            pl.BlockSpec((cout, 1), lambda b: (0, 0)),             # conv b
            pl.BlockSpec((cout, HW, h4), lambda b: (0, 0, 0)),     # W_ih^T
            pl.BlockSpec((1, h4), lambda b: (0, 0)),               # lstm bias
            pl.BlockSpec((hidden, h4), lambda b: (0, 0)),          # W_hh^T
            pl.BlockSpec((1, hidden), lambda b: (0, 0)),           # head W
            pl.BlockSpec((1, 1), lambda b: (0, 0)),                # head b
        ],
        out_specs=pl.BlockSpec((1, 1, T), lambda b: (b, 0, 0)),
        compiler_params=pltpu.CompilerParams(
            dimension_semantics=("parallel",)),
    )(patches4, params["conv_w2"], params["conv_b_col"], params["w_ih3"],
      params["lstm_b"], params["w_hh_t"], params["v_w_row"], params["v_b"])
    return out.reshape(B, T)


# --------------------------------- glue --------------------------------------

def _im2col_nphw(x, kh, kw, stride, pad):
    """x: (N, C, H, W) -> (N, C*kh*kw, Ho*Wo) in PyTorch Conv2d flatten order."""
    n, c, h, w = x.shape
    xp = jnp.pad(x, ((0, 0), (0, 0), (pad, pad), (pad, pad)))
    ho = (h + 2 * pad - kh) // stride + 1
    wo = (w + 2 * pad - kw) // stride + 1
    pieces = []
    for i in range(kh):
        for j in range(kw):
            pieces.append(
                xp[:, :, i:i + stride * ho:stride, j:j + stride * wo:stride])
    p = jnp.stack(pieces, axis=2)                # (N, C, kh*kw, Ho, Wo)
    return p.reshape(n, c * kh * kw, ho * wo), ho, wo


@functools.partial(jax.jit, static_argnames=("kh", "kw", "stride", "pad"))
def cnn_lstm_critic_forward(obs, params, *, kh, kw, stride, pad):
    """obs: (B, T, C, H, W) f32 -> value estimates (B, T) f32."""
    B, T, C, H, W = obs.shape
    x = obs.reshape(B * T, C, H, W)                     # row n = b*T + t
    # TODO(synk): im2col still materializes the kh*kw-inflated patch tensor in
    # HBM; in-kernel patch extraction from NCHW tiles (pl.ANY + manual DMA)
    # would remove that traffic on bandwidth-limited chips (v5e).
    patches, ho, wo = _im2col_nphw(x, kh, kw, stride, pad)
    P = patches.shape[1]
    patches4 = patches.reshape(B, T, P, ho * wo)        # (B, T, P, HW)
    hidden = params["w_hh_t"].shape[0]
    cout = params["conv_w2"].shape[0]
    return fused_forward_pallas(patches4, params, seq_len=T, hidden=hidden,
                                cout=cout)


# ------------------------- pure-JAX reference check --------------------------

def reference_forward(obs, raw, *, stride, pad):
    B, T, C, H, W = obs.shape
    x = obs.reshape(B * T, C, H, W)
    y = lax.conv_general_dilated(
        x, raw["conv_w"], window_strides=(stride, stride),
        padding=[(pad, pad), (pad, pad)],
        dimension_numbers=("NCHW", "OIHW", "NCHW"))
    y = jnp.maximum(y + raw["conv_b"][None, :, None, None], 0.0)
    feats = y.reshape(B, T, -1)                         # (B, T, F)
    hh = raw["w_hh"].shape[1]
    w_ih_t = raw["w_ih"].T
    w_hh_t = raw["w_hh"].T
    bias = raw["b_ih"] + raw["b_hh"]
    h = jnp.zeros((B, hh), jnp.float32)
    c = jnp.zeros((B, hh), jnp.float32)
    vs = []
    for t in range(T):
        gates = feats[:, t, :] @ w_ih_t + h @ w_hh_t + bias
        i = jax.nn.sigmoid(gates[:, 0 * hh:1 * hh])
        f = jax.nn.sigmoid(gates[:, 1 * hh:2 * hh])
        g = jnp.tanh(gates[:, 2 * hh:3 * hh])
        o = jax.nn.sigmoid(gates[:, 3 * hh:4 * hh])
        c = f * c + i * g
        h = o * jnp.tanh(c)
        vs.append(h @ raw["v_w"].T + raw["v_b"][None, :])
    return jnp.concatenate(vs, axis=1)                  # (B, T)


# ----------------------------------- main -------------------------------------

if __name__ == "__main__":
    # Config consistent with the module: obs_dim=(4,16,16), out_channels=[8],
    # kernel=3, stride=2, padding=1, features_out=[32] -> flatten = 8*8*8=512.
    B, T = 2, 8
    C, H, W = 4, 16, 16
    COUT, KH, KW, STRIDE, PAD = 8, 3, 3, 2, 1
    HO = (H + 2 * PAD - KH) // STRIDE + 1
    WO = (W + 2 * PAD - KW) // STRIDE + 1
    HW = HO * WO
    F = COUT * HW                    # 512 conv-flatten features
    HH = 32                          # LSTM hidden / features_out

    key = jax.random.PRNGKey(0)
    ks = jax.random.split(key, 9)
    conv_w = 0.1 * jax.random.normal(ks[0], (COUT, C, KH, KW), jnp.float32)
    conv_b = 0.1 * jax.random.normal(ks[1], (COUT,), jnp.float32)
    w_ih = 0.05 * jax.random.normal(ks[2], (4 * HH, F), jnp.float32)
    w_hh = 0.05 * jax.random.normal(ks[3], (4 * HH, HH), jnp.float32)
    b_ih = 0.05 * jax.random.normal(ks[4], (4 * HH,), jnp.float32)
    b_hh = 0.05 * jax.random.normal(ks[5], (4 * HH,), jnp.float32)
    v_w = 0.1 * jax.random.normal(ks[6], (1, HH), jnp.float32)
    v_b = 0.1 * jax.random.normal(ks[7], (1,), jnp.float32)

    raw = {"conv_w": conv_w, "conv_b": conv_b, "w_ih": w_ih, "w_hh": w_hh,
           "b_ih": b_ih, "b_hh": b_hh, "v_w": v_w, "v_b": v_b}

    # One-time weight preparation OUTSIDE the jitted forward (no per-call
    # reshapes / casts of static weights; everything stays f32).
    params = {
        "conv_w2": conv_w.reshape(COUT, C * KH * KW),          # (Cout, P)
        "conv_b_col": conv_b.reshape(COUT, 1),                 # (Cout, 1)
        "w_ih3": w_ih.T.reshape(COUT, HW, 4 * HH),             # (Cout, HW, 4H)
        "w_hh_t": w_hh.T,                                      # (H, 4H)
        "lstm_b": (b_ih + b_hh).reshape(1, 4 * HH),            # (1, 4H)
        "v_w_row": v_w,                                        # (1, H)
        "v_b": v_b.reshape(1, 1),                              # (1, 1)
    }

    obs = jax.random.normal(ks[8], (B, T, C, H, W), jnp.float32)

    v = cnn_lstm_critic_forward(obs, params, kh=KH, kw=KW,
                                stride=STRIDE, pad=PAD)
    v = jax.block_until_ready(v)
    assert v.shape == (B, T)

    v_ref = reference_forward(obs, raw, stride=STRIDE, pad=PAD)
    np.testing.assert_allclose(np.asarray(v), np.asarray(v_ref),
                               rtol=1e-2, atol=1e-2)
    print("KERNEL_OK")
</pallas_src>

<mosaic_0001>
module attributes {stable_mosaic.version = 11 : i64} {
  func.func @_fused_cnn_lstm_critic_kernel(%arg0: i32, %arg1: memref<1x8x36x64xf32, #tpu.memory_space<vmem>>, %arg2: memref<8x36xf32, #tpu.memory_space<vmem>>, %arg3: memref<8x1xf32, #tpu.memory_space<vmem>>, %arg4: memref<8x64x128xf32, #tpu.memory_space<vmem>>, %arg5: memref<1x128xf32, #tpu.memory_space<vmem>>, %arg6: memref<32x128xf32, #tpu.memory_space<vmem>>, %arg7: memref<1x32xf32, #tpu.memory_space<vmem>>, %arg8: memref<1x1xf32, #tpu.memory_space<vmem>>, %arg9: memref<1x1x8xf32, #tpu.memory_space<vmem>>) attributes {dimension_semantics = [#tpu.dimension_semantics<parallel>], iteration_bounds = array<i64: 2>, scalar_prefetch = 0 : i64, scratch_operands = 0 : i64, tpu.core_type = #tpu.core_type<tc>, window_params = [{transform_indices = @transform_0, window_bounds = array<i64: 1, 8, 36, 64>}, {pipeline_mode = #tpu.pipeline_mode<synchronous>, transform_indices = @transform_1, window_bounds = array<i64: 8, 36>}, {pipeline_mode = #tpu.pipeline_mode<synchronous>, transform_indices = @transform_2, window_bounds = array<i64: 8, 1>}, {pipeline_mode = #tpu.pipeline_mode<synchronous>, transform_indices = @transform_3, window_bounds = array<i64: 8, 64, 128>}, {pipeline_mode = #tpu.pipeline_mode<synchronous>, transform_indices = @transform_4, window_bounds = array<i64: 1, 128>}, {pipeline_mode = #tpu.pipeline_mode<synchronous>, transform_indices = @transform_5, window_bounds = array<i64: 32, 128>}, {pipeline_mode = #tpu.pipeline_mode<synchronous>, transform_indices = @transform_6, window_bounds = array<i64: 1, 32>}, {pipeline_mode = #tpu.pipeline_mode<synchronous>, transform_indices = @transform_7, window_bounds = array<i64: 1, 1>}, {transform_indices = @transform_8, window_bounds = array<i64: 1, 1, 8>}]} {
    %c0 = arith.constant 0 : index
    %c0_0 = arith.constant 0 : index
    %0 = vector.load %arg2[%c0, %c0_0] : memref<8x36xf32, #tpu.memory_space<vmem>>, vector<8x36xf32>
    %c0_1 = arith.constant 0 : index
    %c0_2 = arith.constant 0 : index
    %1 = vector.load %arg3[%c0_1, %c0_2] : memref<8x1xf32, #tpu.memory_space<vmem>>, vector<8x1xf32>
    %c0_3 = arith.constant 0 : index
    %c0_4 = arith.constant 0 : index
    %c0_5 = arith.constant 0 : index
    %c0_6 = arith.constant 0 : index
    %2 = vector.load %arg1[%c0_3, %c0_4, %c0_5, %c0_6] : memref<1x8x36x64xf32, #tpu.memory_space<vmem>>, vector<1x1x36x64xf32>
    %3 = vector.shape_cast %2 : vector<1x1x36x64xf32> to vector<36x64xf32>
    %cst = arith.constant dense<0.000000e+00> : vector<8x64xf32>
    %4 = tpu.matmul %0, %3, %cst {dimension_numbers = #tpu.dot_dimension_numbers<[1], [0], [0], [1], [0, 0, 1, 1], [], []>} : vector<8x36xf32>, vector<36x64xf32>, vector<8x64xf32> -> vector<8x64xf32>
    %5 = vector.broadcast %1 : vector<8x1xf32> to vector<8x64xf32>
    %6 = arith.addf %4, %5 : vector<8x64xf32>
    %cst_7 = arith.constant 0.000000e+00 : f32
    %7 = vector.broadcast %cst_7 : f32 to vector<8x64xf32>
    %8 = arith.maximumf %6, %7 : vector<8x64xf32>
    %c0_8 = arith.constant 0 : index
    %c1 = arith.constant 1 : index
    %c0_9 = arith.constant 0 : index
    %c0_10 = arith.constant 0 : index
    %9 = vector.load %arg1[%c0_8, %c1, %c0_9, %c0_10] : memref<1x8x36x64xf32, #tpu.memory_space<vmem>>, vector<1x1x36x64xf32>
    %10 = vector.shape_cast %9 : vector<1x1x36x64xf32> to vector<36x64xf32>
    %cst_11 = arith.constant dense<0.000000e+00> : vector<8x64xf32>
    %11 = tpu.matmul %0, %10, %cst_11 {dimension_numbers = #tpu.dot_dimension_numbers<[1], [0], [0], [1], [0, 0, 1, 1], [], []>} : vector<8x36xf32>, vector<36x64xf32>, vector<8x64xf32> -> vector<8x64xf32>
    %12 = vector.broadcast %1 : vector<8x1xf32> to vector<8x64xf32>
    %13 = arith.addf %11, %12 : vector<8x64xf32>
    %cst_12 = arith.constant 0.000000e+00 : f32
    %14 = vector.broadcast %cst_12 : f32 to vector<8x64xf32>
    %15 = arith.maximumf %13, %14 : vector<8x64xf32>
    %c0_13 = arith.constant 0 : index
    %c2 = arith.constant 2 : index
    %c0_14 = arith.constant 0 : index
    %c0_15 = arith.constant 0 : index
    %16 = vector.load %arg1[%c0_13, %c2, %c0_14, %c0_15] : memref<1x8x36x64xf32, #tpu.memory_space<vmem>>, vector<1x1x36x64xf32>
    %17 = vector.shape_cast %16 : vector<1x1x36x64xf32> to vector<36x64xf32>
    %cst_16 = arith.constant dense<0.000000e+00> : vector<8x64xf32>
    %18 = tpu.matmul %0, %17, %cst_16 {dimension_numbers = #tpu.dot_dimension_numbers<[1], [0], [0], [1], [0, 0, 1, 1], [], []>} : vector<8x36xf32>, vector<36x64xf32>, vector<8x64xf32> -> vector<8x64xf32>
    %19 = vector.broadcast %1 : vector<8x1xf32> to vector<8x64xf32>
    %20 = arith.addf %18, %19 : vector<8x64xf32>
    %cst_17 = arith.constant 0.000000e+00 : f32
    %21 = vector.broadcast %cst_17 : f32 to vector<8x64xf32>
    %22 = arith.maximumf %20, %21 : vector<8x64xf32>
    %c0_18 = arith.constant 0 : index
    %c3 = arith.constant 3 : index
    %c0_19 = arith.constant 0 : index
    %c0_20 = arith.constant 0 : index
    %23 = vector.load %arg1[%c0_18, %c3, %c0_19, %c0_20] : memref<1x8x36x64xf32, #tpu.memory_space<vmem>>, vector<1x1x36x64xf32>
    %24 = vector.shape_cast %23 : vector<1x1x36x64xf32> to vector<36x64xf32>
    %cst_21 = arith.constant dense<0.000000e+00> : vector<8x64xf32>
    %25 = tpu.matmul %0, %24, %cst_21 {dimension_numbers = #tpu.dot_dimension_numbers<[1], [0], [0], [1], [0, 0, 1, 1], [], []>} : vector<8x36xf32>, vector<36x64xf32>, vector<8x64xf32> -> vector<8x64xf32>
    %26 = vector.broadcast %1 : vector<8x1xf32> to vector<8x64xf32>
    %27 = arith.addf %25, %26 : vector<8x64xf32>
    %cst_22 = arith.constant 0.000000e+00 : f32
    %28 = vector.broadcast %cst_22 : f32 to vector<8x64xf32>
    %29 = arith.maximumf %27, %28 : vector<8x64xf32>
    %c0_23 = arith.constant 0 : index
    %c4 = arith.constant 4 : index
    %c0_24 = arith.constant 0 : index
    %c0_25 = arith.constant 0 : index
    %30 = vector.load %arg1[%c0_23, %c4, %c0_24, %c0_25] : memref<1x8x36x64xf32, #tpu.memory_space<vmem>>, vector<1x1x36x64xf32>
    %31 = vector.shape_cast %30 : vector<1x1x36x64xf32> to vector<36x64xf32>
    %cst_26 = arith.constant dense<0.000000e+00> : vector<8x64xf32>
    %32 = tpu.matmul %0, %31, %cst_26 {dimension_numbers = #tpu.dot_dimension_numbers<[1], [0], [0], [1], [0, 0, 1, 1], [], []>} : vector<8x36xf32>, vector<36x64xf32>, vector<8x64xf32> -> vector<8x64xf32>
    %33 = vector.broadcast %1 : vector<8x1xf32> to vector<8x64xf32>
    %34 = arith.addf %32, %33 : vector<8x64xf32>
    %cst_27 = arith.constant 0.000000e+00 : f32
    %35 = vector.broadcast %cst_27 : f32 to vector<8x64xf32>
    %36 = arith.maximumf %34, %35 : vector<8x64xf32>
    %c0_28 = arith.constant 0 : index
    %c5 = arith.constant 5 : index
    %c0_29 = arith.constant 0 : index
    %c0_30 = arith.constant 0 : index
    %37 = vector.load %arg1[%c0_28, %c5, %c0_29, %c0_30] : memref<1x8x36x64xf32, #tpu.memory_space<vmem>>, vector<1x1x36x64xf32>
    %38 = vector.shape_cast %37 : vector<1x1x36x64xf32> to vector<36x64xf32>
    %cst_31 = arith.constant dense<0.000000e+00> : vector<8x64xf32>
    %39 = tpu.matmul %0, %38, %cst_31 {dimension_numbers = #tpu.dot_dimension_numbers<[1], [0], [0], [1], [0, 0, 1, 1], [], []>} : vector<8x36xf32>, vector<36x64xf32>, vector<8x64xf32> -> vector<8x64xf32>
    %40 = vector.broadcast %1 : vector<8x1xf32> to vector<8x64xf32>
    %41 = arith.addf %39, %40 : vector<8x64xf32>
    %cst_32 = arith.constant 0.000000e+00 : f32
    %42 = vector.broadcast %cst_32 : f32 to vector<8x64xf32>
    %43 = arith.maximumf %41, %42 : vector<8x64xf32>
    %c0_33 = arith.constant 0 : index
    %c6 = arith.constant 6 : index
    %c0_34 = arith.constant 0 : index
    %c0_35 = arith.constant 0 : index
    %44 = vector.load %arg1[%c0_33, %c6, %c0_34, %c0_35] : memref<1x8x36x64xf32, #tpu.memory_space<vmem>>, vector<1x1x36x64xf32>
    %45 = vector.shape_cast %44 : vector<1x1x36x64xf32> to vector<36x64xf32>
    %cst_36 = arith.constant dense<0.000000e+00> : vector<8x64xf32>
    %46 = tpu.matmul %0, %45, %cst_36 {dimension_numbers = #tpu.dot_dimension_numbers<[1], [0], [0], [1], [0, 0, 1, 1], [], []>} : vector<8x36xf32>, vector<36x64xf32>, vector<8x64xf32> -> vector<8x64xf32>
    %47 = vector.broadcast %1 : vector<8x1xf32> to vector<8x64xf32>
    %48 = arith.addf %46, %47 : vector<8x64xf32>
    %cst_37 = arith.constant 0.000000e+00 : f32
    %49 = vector.broadcast %cst_37 : f32 to vector<8x64xf32>
    %50 = arith.maximumf %48, %49 : vector<8x64xf32>
    %c0_38 = arith.constant 0 : index
    %c7 = arith.constant 7 : index
    %c0_39 = arith.constant 0 : index
    %c0_40 = arith.constant 0 : index
    %51 = vector.load %arg1[%c0_38, %c7, %c0_39, %c0_40] : memref<1x8x36x64xf32, #tpu.memory_space<vmem>>, vector<1x1x36x64xf32>
    %52 = vector.shape_cast %51 : vector<1x1x36x64xf32> to vector<36x64xf32>
    %cst_41 = arith.constant dense<0.000000e+00> : vector<8x64xf32>
    %53 = tpu.matmul %0, %52, %cst_41 {dimension_numbers = #tpu.dot_dimension_numbers<[1], [0], [0], [1], [0, 0, 1, 1], [], []>} : vector<8x36xf32>, vector<36x64xf32>, vector<8x64xf32> -> vector<8x64xf32>
    %54 = vector.broadcast %1 : vector<8x1xf32> to vector<8x64xf32>
    %55 = arith.addf %53, %54 : vector<8x64xf32>
    %cst_42 = arith.constant 0.000000e+00 : f32
    %56 = vector.broadcast %cst_42 : f32 to vector<8x64xf32>
    %57 = arith.maximumf %55, %56 : vector<8x64xf32>
    %58 = vector.shape_cast %8 : vector<8x64xf32> to vector<1x8x64xf32>
    %59 = vector.shape_cast %15 : vector<8x64xf32> to vector<1x8x64xf32>
    %60 = vector.shape_cast %22 : vector<8x64xf32> to vector<1x8x64xf32>
    %61 = vector.shape_cast %29 : vector<8x64xf32> to vector<1x8x64xf32>
    %62 = vector.shape_cast %36 : vector<8x64xf32> to vector<1x8x64xf32>
    %63 = vector.shape_cast %43 : vector<8x64xf32> to vector<1x8x64xf32>
    %64 = vector.shape_cast %50 : vector<8x64xf32> to vector<1x8x64xf32>
    %65 = vector.shape_cast %57 : vector<8x64xf32> to vector<1x8x64xf32>
    %66 = tpu.concatenate %58, %59, %60, %61, %62, %63, %64, %65 in 0 : vector<1x8x64xf32>, vector<1x8x64xf32>, vector<1x8x64xf32>, vector<1x8x64xf32>, vector<1x8x64xf32>, vector<1x8x64xf32>, vector<1x8x64xf32>, vector<1x8x64xf32> -> vector<8x8x64xf32>
    %c0_43 = arith.constant 0 : index
    %c0_44 = arith.constant 0 : index
    %c0_45 = arith.constant 0 : index
    %67 = vector.load %arg4[%c0_43, %c0_44, %c0_45] : memref<8x64x128xf32, #tpu.memory_space<vmem>>, vector<1x64x128xf32>
    %68 = vector.shape_cast %67 : vector<1x64x128xf32> to vector<64x128xf32>
    %69 = vector.extract_strided_slice %66 {offsets = [0, 0, 0], sizes = [8, 1, 64], strides = [1, 1, 1]} : vector<8x8x64xf32> to vector<8x1x64xf32>
    %70 = vector.shape_cast %69 : vector<8x1x64xf32> to vector<8x64xf32>
    %cst_46 = arith.constant dense<0.000000e+00> : vector<8x128xf32>
    %71 = tpu.matmul %70, %68, %cst_46 {dimension_numbers = #tpu.dot_dimension_numbers<[1], [0], [0], [1], [0, 0, 1, 1], [], []>} : vector<8x64xf32>, vector<64x128xf32>, vector<8x128xf32> -> vector<8x128xf32>
    %c1_47 = arith.constant 1 : index
    %c0_48 = arith.constant 0 : index
    %c0_49 = arith.constant 0 : index
    %72 = vector.load %arg4[%c1_47, %c0_48, %c0_49] : memref<8x64x128xf32, #tpu.memory_space<vmem>>, vector<1x64x128xf32>
    %73 = vector.shape_cast %72 : vector<1x64x128xf32> to vector<64x128xf32>
    %74 = vector.extract_strided_slice %66 {offsets = [0, 1, 0], sizes = [8, 1, 64], strides = [1, 1, 1]} : vector<8x8x64xf32> to vector<8x1x64xf32>
    %75 = vector.shape_cast %74 : vector<8x1x64xf32> to vector<8x64xf32>
    %cst_50 = arith.constant dense<0.000000e+00> : vector<8x128xf32>
    %76 = tpu.matmul %75, %73, %cst_50 {dimension_numbers = #tpu.dot_dimension_numbers<[1], [0], [0], [1], [0, 0, 1, 1], [], []>} : vector<8x64xf32>, vector<64x128xf32>, vector<8x128xf32> -> vector<8x128xf32>
    %77 = arith.addf %71, %76 : vector<8x128xf32>
    %c2_51 = arith.constant 2 : index
    %c0_52 = arith.constant 0 : index
    %c0_53 = arith.constant 0 : index
    %78 = vector.load %arg4[%c2_51, %c0_52, %c0_53] : memref<8x64x128xf32, #tpu.memory_space<vmem>>, vector<1x64x128xf32>
    %79 = vector.shape_cast %78 : vector<1x64x128xf32> to vector<64x128xf32>
    %80 = vector.extract_strided_slice %66 {offsets = [0, 2, 0], sizes = [8, 1, 64], strides = [1, 1, 1]} : vector<8x8x64xf32> to vector<8x1x64xf32>
    %81 = vector.shape_cast %80 : vector<8x1x64xf32> to vector<8x64xf32>
    %cst_54 = arith.constant dense<0.000000e+00> : vector<8x128xf32>
    %82 = tpu.matmul %81, %79, %cst_54 {dimension_numbers = #tpu.dot_dimension_numbers<[1], [0], [0], [1], [0, 0, 1, 1], [], []>} : vector<8x64xf32>, vector<64x128xf32>, vector<8x128xf32> -> vector<8x128xf32>
    %83 = arith.addf %77, %82 : vector<8x128xf32>
    %c3_55 = arith.constant 3 : index
    %c0_56 = arith.constant 0 : index
    %c0_57 = arith.constant 0 : index
    %84 = vector.load %arg4[%c3_55, %c0_56, %c0_57] : memref<8x64x128xf32, #tpu.memory_space<vmem>>, vector<1x64x128xf32>
    %85 = vector.shape_cast %84 : vector<1x64x128xf32> to vector<64x128xf32>
    %86 = vector.extract_strided_slice %66 {offsets = [0, 3, 0], sizes = [8, 1, 64], strides = [1, 1, 1]} : vector<8x8x64xf32> to vector<8x1x64xf32>
    %87 = vector.shape_cast %86 : vector<8x1x64xf32> to vector<8x64xf32>
    %cst_58 = arith.constant dense<0.000000e+00> : vector<8x128xf32>
    %88 = tpu.matmul %87, %85, %cst_58 {dimension_numbers = #tpu.dot_dimension_numbers<[1], [0], [0], [1], [0, 0, 1, 1], [], []>} : vector<8x64xf32>, vector<64x128xf32>, vector<8x128xf32> -> vector<8x128xf32>
    %89 = arith.addf %83, %88 : vector<8x128xf32>
    %c4_59 = arith.constant 4 : index
    %c0_60 = arith.constant 0 : index
    %c0_61 = arith.constant 0 : index
    %90 = vector.load %arg4[%c4_59, %c0_60, %c0_61] : memref<8x64x128xf32, #tpu.memory_space<vmem>>, vector<1x64x128xf32>
    %91 = vector.shape_cast %90 : vector<1x64x128xf32> to vector<64x128xf32>
    %92 = vector.extract_strided_slice %66 {offsets = [0, 4, 0], sizes = [8, 1, 64], strides = [1, 1, 1]} : vector<8x8x64xf32> to vector<8x1x64xf32>
    %93 = vector.shape_cast %92 : vector<8x1x64xf32> to vector<8x64xf32>
    %cst_62 = arith.constant dense<0.000000e+00> : vector<8x128xf32>
    %94 = tpu.matmul %93, %91, %cst_62 {dimension_numbers = #tpu.dot_dimension_numbers<[1], [0], [0], [1], [0, 0, 1, 1], [], []>} : vector<8x64xf32>, vector<64x128xf32>, vector<8x128xf32> -> vector<8x128xf32>
    %95 = arith.addf %89, %94 : vector<8x128xf32>
    %c5_63 = arith.constant 5 : index
    %c0_64 = arith.constant 0 : index
    %c0_65 = arith.constant 0 : index
    %96 = vector.load %arg4[%c5_63, %c0_64, %c0_65] : memref<8x64x128xf32, #tpu.memory_space<vmem>>, vector<1x64x128xf32>
    %97 = vector.shape_cast %96 : vector<1x64x128xf32> to vector<64x128xf32>
    %98 = vector.extract_strided_slice %66 {offsets = [0, 5, 0], sizes = [8, 1, 64], strides = [1, 1, 1]} : vector<8x8x64xf32> to vector<8x1x64xf32>
    %99 = vector.shape_cast %98 : vector<8x1x64xf32> to vector<8x64xf32>
    %cst_66 = arith.constant dense<0.000000e+00> : vector<8x128xf32>
    %100 = tpu.matmul %99, %97, %cst_66 {dimension_numbers = #tpu.dot_dimension_numbers<[1], [0], [0], [1], [0, 0, 1, 1], [], []>} : vector<8x64xf32>, vector<64x128xf32>, vector<8x128xf32> -> vector<8x128xf32>
    %101 = arith.addf %95, %100 : vector<8x128xf32>
    %c6_67 = arith.constant 6 : index
    %c0_68 = arith.constant 0 : index
    %c0_69 = arith.constant 0 : index
    %102 = vector.load %arg4[%c6_67, %c0_68, %c0_69] : memref<8x64x128xf32, #tpu.memory_space<vmem>>, vector<1x64x128xf32>
    %103 = vector.shape_cast %102 : vector<1x64x128xf32> to vector<64x128xf32>
    %104 = vector.extract_strided_slice %66 {offsets = [0, 6, 0], sizes = [8, 1, 64], strides = [1, 1, 1]} : vector<8x8x64xf32> to vector<8x1x64xf32>
    %105 = vector.shape_cast %104 : vector<8x1x64xf32> to vector<8x64xf32>
    %cst_70 = arith.constant dense<0.000000e+00> : vector<8x128xf32>
    %106 = tpu.matmul %105, %103, %cst_70 {dimension_numbers = #tpu.dot_dimension_numbers<[1], [0], [0], [1], [0, 0, 1, 1], [], []>} : vector<8x64xf32>, vector<64x128xf32>, vector<8x128xf32> -> vector<8x128xf32>
    %107 = arith.addf %101, %106 : vector<8x128xf32>
    %c7_71 = arith.constant 7 : index
    %c0_72 = arith.constant 0 : index
    %c0_73 = arith.constant 0 : index
    %108 = vector.load %arg4[%c7_71, %c0_72, %c0_73] : memref<8x64x128xf32, #tpu.memory_space<vmem>>, vector<1x64x128xf32>
    %109 = vector.shape_cast %108 : vector<1x64x128xf32> to vector<64x128xf32>
    %110 = vector.extract_strided_slice %66 {offsets = [0, 7, 0], sizes = [8, 1, 64], strides = [1, 1, 1]} : vector<8x8x64xf32> to vector<8x1x64xf32>
    %111 = vector.shape_cast %110 : vector<8x1x64xf32> to vector<8x64xf32>
    %cst_74 = arith.constant dense<0.000000e+00> : vector<8x128xf32>
    %112 = tpu.matmul %111, %109, %cst_74 {dimension_numbers = #tpu.dot_dimension_numbers<[1], [0], [0], [1], [0, 0, 1, 1], [], []>} : vector<8x64xf32>, vector<64x128xf32>, vector<8x128xf32> -> vector<8x128xf32>
    %113 = arith.addf %107, %112 : vector<8x128xf32>
    %c0_75 = arith.constant 0 : index
    %c0_76 = arith.constant 0 : index
    %114 = vector.load %arg5[%c0_75, %c0_76] : memref<1x128xf32, #tpu.memory_space<vmem>>, vector<1x128xf32>
    %115 = vector.broadcast %114 : vector<1x128xf32> to vector<8x128xf32>
    %116 = arith.addf %113, %115 : vector<8x128xf32>
    %c0_77 = arith.constant 0 : index
    %c0_78 = arith.constant 0 : index
    %117 = vector.load %arg6[%c0_77, %c0_78] : memref<32x128xf32, #tpu.memory_space<vmem>>, vector<32x128xf32>
    %c0_79 = arith.constant 0 : index
    %c0_80 = arith.constant 0 : index
    %118 = vector.load %arg7[%c0_79, %c0_80] : memref<1x32xf32, #tpu.memory_space<vmem>>, vector<1x32xf32>
    %cst_81 = arith.constant 0.000000e+00 : f32
    %119 = vector.broadcast %cst_81 : f32 to vector<1x32xf32>
    %cst_82 = arith.constant 0.000000e+00 : f32
    %120 = vector.broadcast %cst_82 : f32 to vector<1x32xf32>
    %121 = vector.extract_strided_slice %116 {offsets = [0, 0], sizes = [1, 128], strides = [1, 1]} : vector<8x128xf32> to vector<1x128xf32>
    %cst_83 = arith.constant dense<0.000000e+00> : vector<1x128xf32>
    %122 = tpu.matmul %119, %117, %cst_83 {dimension_numbers = #tpu.dot_dimension_numbers<[1], [0], [0], [1], [0, 0, 1, 1], [], []>} : vector<1x32xf32>, vector<32x128xf32>, vector<1x128xf32> -> vector<1x128xf32>
    %123 = arith.addf %121, %122 : vector<1x128xf32>
    %124 = arith.negf %123 : vector<1x128xf32>
    %125 = math.exp %124 : vector<1x128xf32>
    %cst_84 = arith.constant 1.000000e+00 : f32
    %126 = vector.broadcast %cst_84 : f32 to vector<1x128xf32>
    %127 = arith.addf %126, %125 : vector<1x128xf32>
    %128 = arith.divf %126, %127 : vector<1x128xf32>
    %129 = math.tanh %123 : vector<1x128xf32>
    %130 = vector.extract_strided_slice %128 {offsets = [0, 0], sizes = [1, 32], strides = [1, 1]} : vector<1x128xf32> to vector<1x32xf32>
    %131 = vector.extract_strided_slice %128 {offsets = [0, 32], sizes = [1, 32], strides = [1, 1]} : vector<1x128xf32> to vector<1x32xf32>
    %132 = vector.extract_strided_slice %129 {offsets = [0, 64], sizes = [1, 32], strides = [1, 1]} : vector<1x128xf32> to vector<1x32xf32>
    %133 = vector.extract_strided_slice %128 {offsets = [0, 96], sizes = [1, 32], strides = [1, 1]} : vector<1x128xf32> to vector<1x32xf32>
    %134 = arith.mulf %131, %120 : vector<1x32xf32>
    %135 = arith.mulf %130, %132 : vector<1x32xf32>
    %136 = arith.addf %134, %135 : vector<1x32xf32>
    %137 = math.tanh %136 : vector<1x32xf32>
    %138 = arith.mulf %133, %137 : vector<1x32xf32>
    %139 = arith.mulf %138, %118 : vector<1x32xf32>
    %cst_85 = arith.constant dense<0.000000e+00> : vector<1xf32>
    %140 = vector.multi_reduction <add>, %139, %cst_85 [1] : vector<1x32xf32> to vector<1xf32>
    %141 = vector.shape_cast %140 : vector<1xf32> to vector<1x1xf32>
    %142 = vector.extract_strided_slice %116 {offsets = [1, 0], sizes = [1, 128], strides = [1, 1]} : vector<8x128xf32> to vector<1x128xf32>
    %cst_86 = arith.constant dense<0.000000e+00> : vector<1x128xf32>
    %143 = tpu.matmul %138, %117, %cst_86 {dimension_numbers = #tpu.dot_dimension_numbers<[1], [0], [0], [1], [0, 0, 1, 1], [], []>} : vector<1x32xf32>, vector<32x128xf32>, vector<1x128xf32> -> vector<1x128xf32>
    %144 = arith.addf %142, %143 : vector<1x128xf32>
    %145 = arith.negf %144 : vector<1x128xf32>
    %146 = math.exp %145 : vector<1x128xf32>
    %cst_87 = arith.constant 1.000000e+00 : f32
    %147 = vector.broadcast %cst_87 : f32 to vector<1x128xf32>
    %148 = arith.addf %147, %146 : vector<1x128xf32>
    %149 = arith.divf %147, %148 : vector<1x128xf32>
    %150 = math.tanh %144 : vector<1x128xf32>
    %151 = vector.extract_strided_slice %149 {offsets = [0, 0], sizes = [1, 32], strides = [1, 1]} : vector<1x128xf32> to vector<1x32xf32>
    %152 = vector.extract_strided_slice %149 {offsets = [0, 32], sizes = [1, 32], strides = [1, 1]} : vector<1x128xf32> to vector<1x32xf32>
    %153 = vector.extract_strided_slice %150 {offsets = [0, 64], sizes = [1, 32], strides = [1, 1]} : vector<1x128xf32> to vector<1x32xf32>
    %154 = vector.extract_strided_slice %149 {offsets = [0, 96], sizes = [1, 32], strides = [1, 1]} : vector<1x128xf32> to vector<1x32xf32>
    %155 = arith.mulf %152, %136 : vector<1x32xf32>
    %156 = arith.mulf %151, %153 : vector<1x32xf32>
    %157 = arith.addf %155, %156 : vector<1x32xf32>
    %158 = math.tanh %157 : vector<1x32xf32>
    %159 = arith.mulf %154, %158 : vector<1x32xf32>
    %160 = arith.mulf %159, %118 : vector<1x32xf32>
    %cst_88 = arith.constant dense<0.000000e+00> : vector<1xf32>
    %161 = vector.multi_reduction <add>, %160, %cst_88 [1] : vector<1x32xf32> to vector<1xf32>
    %162 = vector.shape_cast %161 : vector<1xf32> to vector<1x1xf32>
    %163 = vector.extract_strided_slice %116 {offsets = [2, 0], sizes = [1, 128], strides = [1, 1]} : vector<8x128xf32> to vector<1x128xf32>
    %cst_89 = arith.constant dense<0.000000e+00> : vector<1x128xf32>
    %164 = tpu.matmul %159, %117, %cst_89 {dimension_numbers = #tpu.dot_dimension_numbers<[1], [0], [0], [1], [0, 0, 1, 1], [], []>} : vector<1x32xf32>, vector<32x128xf32>, vector<1x128xf32> -> vector<1x128xf32>
    %165 = arith.addf %163, %164 : vector<1x128xf32>
    %166 = arith.negf %165 : vector<1x128xf32>
    %167 = math.exp %166 : vector<1x128xf32>
    %cst_90 = arith.constant 1.000000e+00 : f32
    %168 = vector.broadcast %cst_90 : f32 to vector<1x128xf32>
    %169 = arith.addf %168, %167 : vector<1x128xf32>
    %170 = arith.divf %168, %169 : vector<1x128xf32>
    %171 = math.tanh %165 : vector<1x128xf32>
    %172 = vector.extract_strided_slice %170 {offsets = [0, 0], sizes = [1, 32], strides = [1, 1]} : vector<1x128xf32> to vector<1x32xf32>
    %173 = vector.extract_strided_slice %170 {offsets = [0, 32], sizes = [1, 32], strides = [1, 1]} : vector<1x128xf32> to vector<1x32xf32>
    %174 = vector.extract_strided_slice %171 {offsets = [0, 64], sizes = [1, 32], strides = [1, 1]} : vector<1x128xf32> to vector<1x32xf32>
    %175 = vector.extract_strided_slice %170 {offsets = [0, 96], sizes = [1, 32], strides = [1, 1]} : vector<1x128xf32> to vector<1x32xf32>
    %176 = arith.mulf %173, %157 : vector<1x32xf32>
    %177 = arith.mulf %172, %174 : vector<1x32xf32>
    %178 = arith.addf %176, %177 : vector<1x32xf32>
    %179 = math.tanh %178 : vector<1x32xf32>
    %180 = arith.mulf %175, %179 : vector<1x32xf32>
    %181 = arith.mulf %180, %118 : vector<1x32xf32>
    %cst_91 = arith.constant dense<0.000000e+00> : vector<1xf32>
    %182 = vector.multi_reduction <add>, %181, %cst_91 [1] : vector<1x32xf32> to vector<1xf32>
    %183 = vector.shape_cast %182 : vector<1xf32> to vector<1x1xf32>
    %184 = vector.extract_strided_slice %116 {offsets = [3, 0], sizes = [1, 128], strides = [1, 1]} : vector<8x128xf32> to vector<1x128xf32>
    %cst_92 = arith.constant dense<0.000000e+00> : vector<1x128xf32>
    %185 = tpu.matmul %180, %117, %cst_92 {dimension_numbers = #tpu.dot_dimension_numbers<[1], [0], [0], [1], [0, 0, 1, 1], [], []>} : vector<1x32xf32>, vector<32x128xf32>, vector<1x128xf32> -> vector<1x128xf32>
    %186 = arith.addf %184, %185 : vector<1x128xf32>
    %187 = arith.negf %186 : vector<1x128xf32>
    %188 = math.exp %187 : vector<1x128xf32>
    %cst_93 = arith.constant 1.000000e+00 : f32
    %189 = vector.broadcast %cst_93 : f32 to vector<1x128xf32>
    %190 = arith.addf %189, %188 : vector<1x128xf32>
    %191 = arith.divf %189, %190 : vector<1x128xf32>
    %192 = math.tanh %186 : vector<1x128xf32>
    %193 = vector.extract_strided_slice %191 {offsets = [0, 0], sizes = [1, 32], strides = [1, 1]} : vector<1x128xf32> to vector<1x32xf32>
    %194 = vector.extract_strided_slice %191 {offsets = [0, 32], sizes = [1, 32], strides = [1, 1]} : vector<1x128xf32> to vector<1x32xf32>
    %195 = vector.extract_strided_slice %192 {offsets = [0, 64], sizes = [1, 32], strides = [1, 1]} : vector<1x128xf32> to vector<1x32xf32>
    %196 = vector.extract_strided_slice %191 {offsets = [0, 96], sizes = [1, 32], strides = [1, 1]} : vector<1x128xf32> to vector<1x32xf32>
    %197 = arith.mulf %194, %178 : vector<1x32xf32>
    %198 = arith.mulf %193, %195 : vector<1x32xf32>
    %199 = arith.addf %197, %198 : vector<1x32xf32>
    %200 = math.tanh %199 : vector<1x32xf32>
    %201 = arith.mulf %196, %200 : vector<1x32xf32>
    %202 = arith.mulf %201, %118 : vector<1x32xf32>
    %cst_94 = arith.constant dense<0.000000e+00> : vector<1xf32>
    %203 = vector.multi_reduction <add>, %202, %cst_94 [1] : vector<1x32xf32> to vector<1xf32>
    %204 = vector.shape_cast %203 : vector<1xf32> to vector<1x1xf32>
    %205 = vector.extract_strided_slice %116 {offsets = [4, 0], sizes = [1, 128], strides = [1, 1]} : vector<8x128xf32> to vector<1x128xf32>
    %cst_95 = arith.constant dense<0.000000e+00> : vector<1x128xf32>
    %206 = tpu.matmul %201, %117, %cst_95 {dimension_numbers = #tpu.dot_dimension_numbers<[1], [0], [0], [1], [0, 0, 1, 1], [], []>} : vector<1x32xf32>, vector<32x128xf32>, vector<1x128xf32> -> vector<1x128xf32>
    %207 = arith.addf %205, %206 : vector<1x128xf32>
    %208 = arith.negf %207 : vector<1x128xf32>
    %209 = math.exp %208 : vector<1x128xf32>
    %cst_96 = arith.constant 1.000000e+00 : f32
    %210 = vector.broadcast %cst_96 : f32 to vector<1x128xf32>
    %211 = arith.addf %210, %209 : vector<1x128xf32>
    %212 = arith.divf %210, %211 : vector<1x128xf32>
    %213 = math.tanh %207 : vector<1x128xf32>
    %214 = vector.extract_strided_slice %212 {offsets = [0, 0], sizes = [1, 32], strides = [1, 1]} : vector<1x128xf32> to vector<1x32xf32>
    %215 = vector.extract_strided_slice %212 {offsets = [0, 32], sizes = [1, 32], strides = [1, 1]} : vector<1x128xf32> to vector<1x32xf32>
    %216 = vector.extract_strided_slice %213 {offsets = [0, 64], sizes = [1, 32], strides = [1, 1]} : vector<1x128xf32> to vector<1x32xf32>
    %217 = vector.extract_strided_slice %212 {offsets = [0, 96], sizes = [1, 32], strides = [1, 1]} : vector<1x128xf32> to vector<1x32xf32>
    %218 = arith.mulf %215, %199 : vector<1x32xf32>
    %219 = arith.mulf %214, %216 : vector<1x32xf32>
    %220 = arith.addf %218, %219 : vector<1x32xf32>
    %221 = math.tanh %220 : vector<1x32xf32>
    %222 = arith.mulf %217, %221 : vector<1x32xf32>
    %223 = arith.mulf %222, %118 : vector<1x32xf32>
    %cst_97 = arith.constant dense<0.000000e+00> : vector<1xf32>
    %224 = vector.multi_reduction <add>, %223, %cst_97 [1] : vector<1x32xf32> to vector<1xf32>
    %225 = vector.shape_cast %224 : vector<1xf32> to vector<1x1xf32>
    %226 = vector.extract_strided_slice %116 {offsets = [5, 0], sizes = [1, 128], strides = [1, 1]} : vector<8x128xf32> to vector<1x128xf32>
    %cst_98 = arith.constant dense<0.000000e+00> : vector<1x128xf32>
    %227 = tpu.matmul %222, %117, %cst_98 {dimension_numbers = #tpu.dot_dimension_numbers<[1], [0], [0], [1], [0, 0, 1, 1], [], []>} : vector<1x32xf32>, vector<32x128xf32>, vector<1x128xf32> -> vector<1x128xf32>
    %228 = arith.addf %226, %227 : vector<1x128xf32>
    %229 = arith.negf %228 : vector<1x128xf32>
    %230 = math.exp %229 : vector<1x128xf32>
    %cst_99 = arith.constant 1.000000e+00 : f32
    %231 = vector.broadcast %cst_99 : f32 to vector<1x128xf32>
    %232 = arith.addf %231, %230 : vector<1x128xf32>
    %233 = arith.divf %231, %232 : vector<1x128xf32>
    %234 = math.tanh %228 : vector<1x128xf32>
    %235 = vector.extract_strided_slice %233 {offsets = [0, 0], sizes = [1, 32], strides = [1, 1]} : vector<1x128xf32> to vector<1x32xf32>
    %236 = vector.extract_strided_slice %233 {offsets = [0, 32], sizes = [1, 32], strides = [1, 1]} : vector<1x128xf32> to vector<1x32xf32>
    %237 = vector.extract_strided_slice %234 {offsets = [0, 64], sizes = [1, 32], strides = [1, 1]} : vector<1x128xf32> to vector<1x32xf32>
    %238 = vector.extract_strided_slice %233 {offsets = [0, 96], sizes = [1, 32], strides = [1, 1]} : vector<1x128xf32> to vector<1x32xf32>
    %239 = arith.mulf %236, %220 : vector<1x32xf32>
    %240 = arith.mulf %235, %237 : vector<1x32xf32>
    %241 = arith.addf %239, %240 : vector<1x32xf32>
    %242 = math.tanh %241 : vector<1x32xf32>
    %243 = arith.mulf %238, %242 : vector<1x32xf32>
    %244 = arith.mulf %243, %118 : vector<1x32xf32>
    %cst_100 = arith.constant dense<0.000000e+00> : vector<1xf32>
    %245 = vector.multi_reduction <add>, %244, %cst_100 [1] : vector<1x32xf32> to vector<1xf32>
    %246 = vector.shape_cast %245 : vector<1xf32> to vector<1x1xf32>
    %247 = vector.extract_strided_slice %116 {offsets = [6, 0], sizes = [1, 128], strides = [1, 1]} : vector<8x128xf32> to vector<1x128xf32>
    %cst_101 = arith.constant dense<0.000000e+00> : vector<1x128xf32>
    %248 = tpu.matmul %243, %117, %cst_101 {dimension_numbers = #tpu.dot_dimension_numbers<[1], [0], [0], [1], [0, 0, 1, 1], [], []>} : vector<1x32xf32>, vector<32x128xf32>, vector<1x128xf32> -> vector<1x128xf32>
    %249 = arith.addf %247, %248 : vector<1x128xf32>
    %250 = arith.negf %249 : vector<1x128xf32>
    %251 = math.exp %250 : vector<1x128xf32>
    %cst_102 = arith.constant 1.000000e+00 : f32
    %252 = vector.broadcast %cst_102 : f32 to vector<1x128xf32>
    %253 = arith.addf %252, %251 : vector<1x128xf32>
    %254 = arith.divf %252, %253 : vector<1x128xf32>
    %255 = math.tanh %249 : vector<1x128xf32>
    %256 = vector.extract_strided_slice %254 {offsets = [0, 0], sizes = [1, 32], strides = [1, 1]} : vector<1x128xf32> to vector<1x32xf32>
    %257 = vector.extract_strided_slice %254 {offsets = [0, 32], sizes = [1, 32], strides = [1, 1]} : vector<1x128xf32> to vector<1x32xf32>
    %258 = vector.extract_strided_slice %255 {offsets = [0, 64], sizes = [1, 32], strides = [1, 1]} : vector<1x128xf32> to vector<1x32xf32>
    %259 = vector.extract_strided_slice %254 {offsets = [0, 96], sizes = [1, 32], strides = [1, 1]} : vector<1x128xf32> to vector<1x32xf32>
    %260 = arith.mulf %257, %241 : vector<1x32xf32>
    %261 = arith.mulf %256, %258 : vector<1x32xf32>
    %262 = arith.addf %260, %261 : vector<1x32xf32>
    %263 = math.tanh %262 : vector<1x32xf32>
    %264 = arith.mulf %259, %263 : vector<1x32xf32>
    %265 = arith.mulf %264, %118 : vector<1x32xf32>
    %cst_103 = arith.constant dense<0.000000e+00> : vector<1xf32>
    %266 = vector.multi_reduction <add>, %265, %cst_103 [1] : vector<1x32xf32> to vector<1xf32>
    %267 = vector.shape_cast %266 : vector<1xf32> to vector<1x1xf32>
    %268 = vector.extract_strided_slice %116 {offsets = [7, 0], sizes = [1, 128], strides = [1, 1]} : vector<8x128xf32> to vector<1x128xf32>
    %cst_104 = arith.constant dense<0.000000e+00> : vector<1x128xf32>
    %269 = tpu.matmul %264, %117, %cst_104 {dimension_numbers = #tpu.dot_dimension_numbers<[1], [0], [0], [1], [0, 0, 1, 1], [], []>} : vector<1x32xf32>, vector<32x128xf32>, vector<1x128xf32> -> vector<1x128xf32>
    %270 = arith.addf %268, %269 : vector<1x128xf32>
    %271 = arith.negf %270 : vector<1x128xf32>
    %272 = math.exp %271 : vector<1x128xf32>
    %cst_105 = arith.constant 1.000000e+00 : f32
    %273 = vector.broadcast %cst_105 : f32 to vector<1x128xf32>
    %274 = arith.addf %273, %272 : vector<1x128xf32>
    %275 = arith.divf %273, %274 : vector<1x128xf32>
    %276 = math.tanh %270 : vector<1x128xf32>
    %277 = vector.extract_strided_slice %275 {offsets = [0, 0], sizes = [1, 32], strides = [1, 1]} : vector<1x128xf32> to vector<1x32xf32>
    %278 = vector.extract_strided_slice %275 {offsets = [0, 32], sizes = [1, 32], strides = [1, 1]} : vector<1x128xf32> to vector<1x32xf32>
    %279 = vector.extract_strided_slice %276 {offsets = [0, 64], sizes = [1, 32], strides = [1, 1]} : vector<1x128xf32> to vector<1x32xf32>
    %280 = vector.extract_strided_slice %275 {offsets = [0, 96], sizes = [1, 32], strides = [1, 1]} : vector<1x128xf32> to vector<1x32xf32>
    %281 = arith.mulf %278, %262 : vector<1x32xf32>
    %282 = arith.mulf %277, %279 : vector<1x32xf32>
    %283 = arith.addf %281, %282 : vector<1x32xf32>
    %284 = math.tanh %283 : vector<1x32xf32>
    %285 = arith.mulf %280, %284 : vector<1x32xf32>
    %286 = arith.mulf %285, %118 : vector<1x32xf32>
    %cst_106 = arith.constant dense<0.000000e+00> : vector<1xf32>
    %287 = vector.multi_reduction <add>, %286, %cst_106 [1] : vector<1x32xf32> to vector<1xf32>
    %288 = vector.shape_cast %287 : vector<1xf32> to vector<1x1xf32>
    %289 = tpu.concatenate %141, %162, %183, %204, %225, %246, %267, %288 in 1 : vector<1x1xf32>, vector<1x1xf32>, vector<1x1xf32>, vector<1x1xf32>, vector<1x1xf32>, vector<1x1xf32>, vector<1x1xf32>, vector<1x1xf32> -> vector<1x8xf32>
    %c0_107 = arith.constant 0 : index
    %c0_108 = arith.constant 0 : index
    %290 = vector.load %arg8[%c0_107, %c0_108] : memref<1x1xf32, #tpu.memory_space<vmem>>, vector<1x1xf32>
    %291 = vector.broadcast %290 : vector<1x1xf32> to vector<1x8xf32>
    %292 = arith.addf %289, %291 : vector<1x8xf32>
    %c0_109 = arith.constant 0 : index
    %c0_110 = arith.constant 0 : index
    %c0_111 = arith.constant 0 : index
    %293 = vector.load %arg9[%c0_109, %c0_110, %c0_111] : memref<1x1x8xf32, #tpu.memory_space<vmem>>, vector<1x1x8xf32>
    %294 = vector.shape_cast %293 : vector<1x1x8xf32> to vector<1x8xf32>
    %295 = vector.shape_cast %292 : vector<1x8xf32> to vector<1x1x8xf32>
    tpu.vector_store %arg9[%c0_109, %c0_110, %c0_111], %295 {strides = array<i32>} : memref<1x1x8xf32, #tpu.memory_space<vmem>>, vector<1x1x8xf32>,
    return
  }
  func.func @transform_0(%arg0: i32) -> (i32, i32, i32, i32) {
    %c0_i32 = arith.constant 0 : i32
    %c0_i32_0 = arith.constant 0 : i32
    %c0_i32_1 = arith.constant 0 : i32
    %c0_i32_2 = arith.constant 0 : i32
    return %arg0, %c0_i32, %c0_i32_0, %c0_i32_1 : i32, i32, i32, i32
  }
  func.func @transform_1(%arg0: i32) -> (i32, i32) {
    %c0_i32 = arith.constant 0 : i32
    %c0_i32_0 = arith.constant 0 : i32
    %c0_i32_1 = arith.constant 0 : i32
    return %c0_i32, %c0_i32_0 : i32, i32
  }
  func.func @transform_2(%arg0: i32) -> (i32, i32) {
    %c0_i32 = arith.constant 0 : i32
    %c0_i32_0 = arith.constant 0 : i32
    %c0_i32_1 = arith.constant 0 : i32
    return %c0_i32, %c0_i32_0 : i32, i32
  }
  func.func @transform_3(%arg0: i32) -> (i32, i32, i32) {
    %c0_i32 = arith.constant 0 : i32
    %c0_i32_0 = arith.constant 0 : i32
    %c0_i32_1 = arith.constant 0 : i32
    %c0_i32_2 = arith.constant 0 : i32
    return %c0_i32, %c0_i32_0, %c0_i32_1 : i32, i32, i32
  }
  func.func @transform_4(%arg0: i32) -> (i32, i32) {
    %c0_i32 = arith.constant 0 : i32
    %c0_i32_0 = arith.constant 0 : i32
    %c0_i32_1 = arith.constant 0 : i32
    return %c0_i32, %c0_i32_0 : i32, i32
  }
  func.func @transform_5(%arg0: i32) -> (i32, i32) {
    %c0_i32 = arith.constant 0 : i32
    %c0_i32_0 = arith.constant 0 : i32
    %c0_i32_1 = arith.constant 0 : i32
    return %c0_i32, %c0_i32_0 : i32, i32
  }
  func.func @transform_6(%arg0: i32) -> (i32, i32) {
    %c0_i32 = arith.constant 0 : i32
    %c0_i32_0 = arith.constant 0 : i32
    %c0_i32_1 = arith.constant 0 : i32
    return %c0_i32, %c0_i32_0 : i32, i32
  }
  func.func @transform_7(%arg0: i32) -> (i32, i32) {
    %c0_i32 = arith.constant 0 : i32
    %c0_i32_0 = arith.constant 0 : i32
    %c0_i32_1 = arith.constant 0 : i32
    return %c0_i32, %c0_i32_0 : i32, i32
  }
  func.func @transform_8(%arg0: i32) -> (i32, i32, i32) {
    %c0_i32 = arith.constant 0 : i32
    %c0_i32_0 = arith.constant 0 : i32
    %c0_i32_1 = arith.constant 0 : i32
    return %arg0, %c0_i32, %c0_i32_0 : i32, i32, i32
  }
}

</mosaic_0001>

<llo_original>
// kernel: cnn_lstm_critic_forward.1
$region0: #{cnn_lstm_critic_forward.1}
  #allocation0 [shape = 'u32[]', space=smem, size = 0x4, offset = 0x4, fixed_abs, tag = 'smem constant byte address 0x4 - core index']
  #allocation1 [shape = 'u32[72,128]{1,0:T(1,128)}', space=vmem, size = 0x9000, scoped, tag = 'internal scratch']
  #allocation2 [shape = 'f32[1,1]{1,0:T(1,128)S(1)}', space=vmem, size = 0x200, scoped, tag = 'scoped memory for cnn_lstm_critic_forward.1']
  %s0 = inlined_call_operand.vmem [shape: f32[2,8,36,64], index: 0, kind: input, shape index: {}]
  %s1 = inlined_call_operand.vmem [shape: f32[8,36], index: 1, kind: input, shape index: {}]
  %s2 = inlined_call_operand.vmem [shape: f32[8,1], index: 2, kind: input, shape index: {}]
  %s3 = inlined_call_operand.vmem [shape: f32[8,64,128], index: 3, kind: input, shape index: {}]
  %s4 = inlined_call_operand.vmem [shape: f32[1,128], index: 4, kind: input, shape index: {}]
  %s5 = inlined_call_operand.vmem [shape: f32[32,128], index: 5, kind: input, shape index: {}]
  %s6 = inlined_call_operand.vmem [shape: f32[1,32], index: 6, kind: input, shape index: {}]
  %s7 = inlined_call_operand.<no memory space> [shape: f32[1,1], index: 7, kind: input, shape index: {}]
  %s8 = inlined_call_operand.hbm [shape: f32[2,1,8], index: 8, kind: output, shape index: {}]
  %s9 = sld [smem:[#allocation0]]
  $region65: #{cnn_lstm_critic_forward.1} parent=0
    _
  %s11 = ssub.s32 1, %s9
  %s12 = scalar_select 0, %s11, %s9
  %v13 = vstv %s7
  %14 = vst [vmem:[#allocation2] sm:$0x1] %v13
  $region1: #{cnn_lstm_critic_forward.1} parent=0
    #allocation3 [shape = 'u8[1024]{0}', space=vmem, size = 0x400, scoped, tag = 'output window, operand 0']
    #allocation4 [shape = 's32[2]{0}', space=sflag, size = 0x8, scoped, tag = 'scoped memory for cnn_lstm_critic_forward.1']
    %15 = vsyncpa [#allocation4], 0
    %s16 = scalar_lea.sflag [#allocation4], 1
    %17 = vsyncpa %s16, 0
    loop: start=0, step=1, limit=4
    $region2: #{cnn_lstm_critic_forward.1} parent=1 // loop_pre_header
      _
    $region3: #{cnn_lstm_critic_forward.1} parent=1 // loop_header
      %s19 = sphi 0, %s23
      %p20 = scmp.ge.s32.totalorder %s19, 4
      %s29 = sphi 0, %s31
      %s32 = sphi 0, %s29
      %s33 = sphi 0, %s32
      %s49 = sphi 0, %s33
      %s53 = sphi 0, %s53
      %s55 = sphi 0, %s53
      %s56 = sphi 0, %s55
      %s70 = sphi 0, %s56
      %s74 = sphi 0, %s74
      %s76 = sphi 0, %s74
      %s77 = sphi 0, %s76
      %s91 = sphi 0, %s77
      %s95 = sphi 0, %s95
      %s97 = sphi 0, %s95
      %s98 = sphi 0, %s97
      %s112 = sphi 0, %s98
      %s116 = sphi 0, %s116
      %s118 = sphi 0, %s116
      %s119 = sphi 0, %s118
      %s133 = sphi 0, %s119
      %s137 = sphi 0, %s137
      %s139 = sphi 0, %s137
      %s140 = sphi 0, %s139
      %s154 = sphi 0, %s140
      %s158 = sphi 0, %s158
      %s160 = sphi 0, %s158
      %s161 = sphi 0, %s160
      %s175 = sphi 0, %s161
      %s179 = sphi 0, %s179
      %s181 = sphi 0, %s179
      %s182 = sphi 0, %s181
      %s196 = sphi 0, %s182
      %s202 = sphi 0, %s204
      %s205 = sphi 0, %s202
      %s206 = sphi 0, %s205
      %s222 = sphi 0, %s206
    $region4: #{cnn_lstm_critic_forward.1} parent=1 // loop_header_branch
      %22 = sbr.rel (%p20) target = $region8
    $region5: #{cnn_lstm_critic_forward.1} parent=1 // loop_body
      %s24 = ssub.s32 %s19, 1
      %s25 = ssub.s32 %s19, 2
      %s26 = sadd.s32 %s19, 1
      %s27 = ssub.s32 %s19, %s26
      %p28 = scmp.eq.s32.totalorder %s27, 0
      %s30 = sadd.s32 %s29, 1
      %s31 = scalar_select %p28, %s29, %s30
      %p34 = pneg %p28
      %p35 = scmp.eq.s32.totalorder %s19, 1
      %p36 = por %p34, %p35
      %p37 = scmp.ne.s32.totalorder %s29, %s32
      %p38 = scmp.eq.s32.totalorder %s19, 0
      %p39 = por %p37, %p38
      %p40 = scmp.ne.s32.totalorder %s29, %s32
      %p41 = scmp.eq.s32.totalorder %s24, 1
      %p42 = por %p40, %p41
      %p43 = scmp.ne.s32.totalorder %s32, %s33
      %p44 = scmp.eq.s32.totalorder %s24, 0
      %p45 = por %p43, %p44
      %p46 = scmp.ne.s32.totalorder %s32, %s33
      %p47 = scmp.eq.s32.totalorder %s25, 1
      %p48 = por %p46, %p47
      %p50 = scmp.ne.s32.totalorder %s33, %s49
      %p51 = scmp.eq.s32.totalorder %s25, 0
      %p52 = por %p50, %p51
      %s54 = sadd.s32 %s53, 1
      %p57 = scmp.eq.s32.totalorder %s19, 1
      %p58 = scmp.ne.s32.totalorder %s53, %s55
      %p59 = scmp.eq.s32.totalorder %s19, 0
      %p60 = por %p58, %p59
      %p61 = scmp.ne.s32.totalorder %s53, %s55
      %p62 = scmp.eq.s32.totalorder %s24, 1
      %p63 = por %p61, %p62
      %p64 = scmp.ne.s32.totalorder %s55, %s56
      %p65 = scmp.eq.s32.totalorder %s24, 0
      %p66 = por %p64, %p65
      %p67 = scmp.ne.s32.totalorder %s55, %s56
      %p68 = scmp.eq.s32.totalorder %s25, 1
      %p69 = por %p67, %p68
      %p71 = scmp.ne.s32.totalorder %s56, %s70
      %p72 = scmp.eq.s32.totalorder %s25, 0
      %p73 = por %p71, %p72
      %s75 = sadd.s32 %s74, 1
      %p78 = scmp.eq.s32.totalorder %s19, 1
      %p79 = scmp.ne.s32.totalorder %s74, %s76
      %p80 = scmp.eq.s32.totalorder %s19, 0
      %p81 = por %p79, %p80
      %p82 = scmp.ne.s32.totalorder %s74, %s76
      %p83 = scmp.eq.s32.totalorder %s24, 1
      %p84 = por %p82, %p83
      %p85 = scmp.ne.s32.totalorder %s76, %s77
      %p86 = scmp.eq.s32.totalorder %s24, 0
      %p87 = por %p85, %p86
      %p88 = scmp.ne.s32.totalorder %s76, %s77
      %p89 = scmp.eq.s32.totalorder %s25, 1
      %p90 = por %p88, %p89
      %p92 = scmp.ne.s32.totalorder %s77, %s91
      %p93 = scmp.eq.s32.totalorder %s25, 0
      %p94 = por %p92, %p93
      %s96 = sadd.s32 %s95, 1
      %p99 = scmp.eq.s32.totalorder %s19, 1
      %p100 = scmp.ne.s32.totalorder %s95, %s97
      %p101 = scmp.eq.s32.totalorder %s19, 0
      %p102 = por %p100, %p101
      %p103 = scmp.ne.s32.totalorder %s95, %s97
      %p104 = scmp.eq.s32.totalorder %s24, 1
      %p105 = por %p103, %p104
      %p106 = scmp.ne.s32.totalorder %s97, %s98
      %p107 = scmp.eq.s32.totalorder %s24, 0
      %p108 = por %p106, %p107
      %p109 = scmp.ne.s32.totalorder %s97, %s98
      %p110 = scmp.eq.s32.totalorder %s25, 1
      %p111 = por %p109, %p110
      %p113 = scmp.ne.s32.totalorder %s98, %s112
      %p114 = scmp.eq.s32.totalorder %s25, 0
      %p115 = por %p113, %p114
      %s117 = sadd.s32 %s116, 1
      %p120 = scmp.eq.s32.totalorder %s19, 1
      %p121 = scmp.ne.s32.totalorder %s116, %s118
      %p122 = scmp.eq.s32.totalorder %s19, 0
      %p123 = por %p121, %p122
      %p124 = scmp.ne.s32.totalorder %s116, %s118
      %p125 = scmp.eq.s32.totalorder %s24, 1
      %p126 = por %p124, %p125
      %p127 = scmp.ne.s32.totalorder %s118, %s119
      %p128 = scmp.eq.s32.totalorder %s24, 0
      %p129 = por %p127, %p128
      %p130 = scmp.ne.s32.totalorder %s118, %s119
      %p131 = scmp.eq.s32.totalorder %s25, 1
      %p132 = por %p130, %p131
      %p134 = scmp.ne.s32.totalorder %s119, %s133
      %p135 = scmp.eq.s32.totalorder %s25, 0
      %p136 = por %p134, %p135
      %s138 = sadd.s32 %s137, 1
      %p141 = scmp.eq.s32.totalorder %s19, 1
      %p142 = scmp.ne.s32.totalorder %s137, %s139
      %p143 = scmp.eq.s32.totalorder %s19, 0
      %p144 = por %p142, %p143
      %p145 = scmp.ne.s32.totalorder %s137, %s139
      %p146 = scmp.eq.s32.totalorder %s24, 1
      %p147 = por %p145, %p146
      %p148 = scmp.ne.s32.totalorder %s139, %s140
      %p149 = scmp.eq.s32.totalorder %s24, 0
      %p150 = por %p148, %p149
      %p151 = scmp.ne.s32.totalorder %s139, %s140
      %p152 = scmp.eq.s32.totalorder %s25, 1
      %p153 = por %p151, %p152
      %p155 = scmp.ne.s32.totalorder %s140, %s154
      %p156 = scmp.eq.s32.totalorder %s25, 0
      %p157 = por %p155, %p156
      %s159 = sadd.s32 %s158, 1
      %p162 = scmp.eq.s32.totalorder %s19, 1
      %p163 = scmp.ne.s32.totalorder %s158, %s160
      %p164 = scmp.eq.s32.totalorder %s19, 0
      %p165 = por %p163, %p164
      %p166 = scmp.ne.s32.totalorder %s158, %s160
      %p167 = scmp.eq.s32.totalorder %s24, 1
      %p168 = por %p166, %p167
      %p169 = scmp.ne.s32.totalorder %s160, %s161
      %p170 = scmp.eq.s32.totalorder %s24, 0
      %p171 = por %p169, %p170
      %p172 = scmp.ne.s32.totalorder %s160, %s161
      %p173 = scmp.eq.s32.totalorder %s25, 1
      %p174 = por %p172, %p173
      %p176 = scmp.ne.s32.totalorder %s161, %s175
      %p177 = scmp.eq.s32.totalorder %s25, 0
      %p178 = por %p176, %p177
      %s180 = sadd.s32 %s179, 1
      %p183 = scmp.eq.s32.totalorder %s19, 1
      %p184 = scmp.ne.s32.totalorder %s179, %s181
      %p185 = scmp.eq.s32.totalorder %s19, 0
      %p186 = por %p184, %p185
      %p187 = scmp.ne.s32.totalorder %s179, %s181
      %p188 = scmp.eq.s32.totalorder %s24, 1
      %p189 = por %p187, %p188
      %p190 = scmp.ne.s32.totalorder %s181, %s182
      %p191 = scmp.eq.s32.totalorder %s24, 0
      %p192 = por %p190, %p191
      %p193 = scmp.ne.s32.totalorder %s181, %s182
      %p194 = scmp.eq.s32.totalorder %s25, 1
      %p195 = por %p193, %p194
      %p197 = scmp.ne.s32.totalorder %s182, %s196
      %p198 = scmp.eq.s32.totalorder %s25, 0
      %p199 = por %p197, %p198
      %s200 = ssub.s32 %s19, %s26
      %p201 = scmp.eq.s32.totalorder %s200, 0
      %s203 = sadd.s32 %s202, 1
      %s204 = scalar_select %p201, %s202, %s203
      %p207 = pneg %p201
      %p208 = scmp.eq.s32.totalorder %s19, 1
      %p209 = por %p207, %p208
      %p210 = scmp.ne.s32.totalorder %s202, %s205
      %p211 = scmp.eq.s32.totalorder %s19, 0
      %p212 = por %p210, %p211
      %p213 = scmp.ne.s32.totalorder %s202, %s205
      %p214 = scmp.eq.s32.totalorder %s24, 1
      %p215 = por %p213, %p214
      %p216 = scmp.ne.s32.totalorder %s205, %s206
      %p217 = scmp.eq.s32.totalorder %s24, 0
      %p218 = por %p216, %p217
      %p219 = scmp.ne.s32.totalorder %s205, %s206
      %p220 = scmp.eq.s32.totalorder %s25, 1
      %p221 = por %p219, %p220
      %p223 = scmp.ne.s32.totalorder %s206, %s222
      %p224 = scmp.eq.s32.totalorder %s25, 0
      %p225 = por %p223, %p224
      %p226 = scmp.le.s32.totalorder 1, %s19
      %p227 = scmp.lt.s32.totalorder %s19, 3
      %p228 = pnand %p226, %p227
      %p229 = pneg %p228
      // Predicated region
      $region9: #{cnn_lstm_critic_forward.1} parent=5 // pred_check
        _
      $region10: #{cnn_lstm_critic_forward.1} parent=5 // pred_check_branch
        %231 = sbr.rel (%p228) target = $region12
      $region11: #{cnn_lstm_critic_forward.1} parent=5 // pred_region
        %s232 = ssub.s32 %s19, 1
        // Predicated region
        $region13: #{cnn_lstm_critic_forward.1} parent=11 // pred_check
          %p233 = pneg %p66
        $region14: #{cnn_lstm_critic_forward.1} parent=11 // pred_check_branch
          %235 = sbr.rel (%p233) target = $region16
        $region15: #{cnn_lstm_critic_forward.1} parent=11 // pred_region
          _
        $region16: #{cnn_lstm_critic_forward.1} parent=11 // pred_fallthru
          _
        // Predicated region
        $region17: #{cnn_lstm_critic_forward.1} parent=11 // pred_check
          %p236 = pneg %p87
        $region18: #{cnn_lstm_critic_forward.1} parent=11 // pred_check_branch
          %238 = sbr.rel (%p236) target = $region20
        $region19: #{cnn_lstm_critic_forward.1} parent=11 // pred_region
          _
        $region20: #{cnn_lstm_critic_forward.1} parent=11 // pred_fallthru
          _
        // Predicated region
        $region21: #{cnn_lstm_critic_forward.1} parent=11 // pred_check
          %p239 = pneg %p108
        $region22: #{cnn_lstm_critic_forward.1} parent=11 // pred_check_branch
          %241 = sbr.rel (%p239) target = $region24
        $region23: #{cnn_lstm_critic_forward.1} parent=11 // pred_region
          _
        $region24: #{cnn_lstm_critic_forward.1} parent=11 // pred_fallthru
          _
        // Predicated region
        $region25: #{cnn_lstm_critic_forward.1} parent=11 // pred_check
          %p242 = pneg %p129
        $region26: #{cnn_lstm_critic_forward.1} parent=11 // pred_check_branch
          %244 = sbr.rel (%p242) target = $region28
        $region27: #{cnn_lstm_critic_forward.1} parent=11 // pred_region
          _
        $region28: #{cnn_lstm_critic_forward.1} parent=11 // pred_fallthru
          _
        // Predicated region
        $region29: #{cnn_lstm_critic_forward.1} parent=11 // pred_check
          %p245 = pneg %p150
        $region30: #{cnn_lstm_critic_forward.1} parent=11 // pred_check_branch
          %247 = sbr.rel (%p245) target = $region32
        $region31: #{cnn_lstm_critic_forward.1} parent=11 // pred_region
          _
        $region32: #{cnn_lstm_critic_forward.1} parent=11 // pred_fallthru
          _
        // Predicated region
        $region33: #{cnn_lstm_critic_forward.1} parent=11 // pred_check
          %p248 = pneg %p171
        $region34: #{cnn_lstm_critic_forward.1} parent=11 // pred_check_branch
          %250 = sbr.rel (%p248) target = $region36
        $region35: #{cnn_lstm_critic_forward.1} parent=11 // pred_region
          _
        $region36: #{cnn_lstm_critic_forward.1} parent=11 // pred_fallthru
          _
        // Predicated region
        $region37: #{cnn_lstm_critic_forward.1} parent=11 // pred_check
          %p251 = pneg %p192
        $region38: #{cnn_lstm_critic_forward.1} parent=11 // pred_check_branch
          %253 = sbr.rel (%p251) target = $region40
        $region39: #{cnn_lstm_critic_forward.1} parent=11 // pred_region
          _
        $region40: #{cnn_lstm_critic_forward.1} parent=11 // pred_fallthru
          _
      $region12: #{cnn_lstm_critic_forward.1} parent=5 // pred_fallthru
        _
      %p254 = scmp.lt.s32.totalorder %s19, 2
      // Predicated region
      $region41: #{cnn_lstm_critic_forward.1} parent=5 // pred_check
        %p255 = pneg %p254
      $region42: #{cnn_lstm_critic_forward.1} parent=5 // pred_check_branch
        %257 = sbr.rel (%p255) target = $region44
      $region43: #{cnn_lstm_critic_forward.1} parent=5 // pred_region
        // Predicated region
        $region45: #{cnn_lstm_critic_forward.1} parent=43 // pred_check
          %p258 = pneg %p39
        $region46: #{cnn_lstm_critic_forward.1} parent=43 // pred_check_branch
          %260 = sbr.rel (%p258) target = $region48
        $region47: #{cnn_lstm_critic_forward.1} parent=43 // pred_region
          %p261 = scmp.lt.s32.totalorder %s19, 1
          %s262 = scalar_select %p261, %s19, 1
          %s263 = smul.addr %s262, 40
          %s264 = smul.addr %s263, 8
          %s265 = scalar_lea.vmem %s0, %s264
        $region48: #{cnn_lstm_critic_forward.1} parent=43 // pred_fallthru
          _
      $region44: #{cnn_lstm_critic_forward.1} parent=5 // pred_fallthru
        _
      %p266 = scmp.le.s32.totalorder 1, %s19
      %p267 = scmp.lt.s32.totalorder %s19, 3
      %p268 = pnand %p266, %p267
      %p269 = pneg %p268
      // Predicated region
      $region49: #{cnn_lstm_critic_forward.1} parent=5 // pred_check
        _
      $region50: #{cnn_lstm_critic_forward.1} parent=5 // pred_check_branch
        %271 = sbr.rel (%p268) target = $region52
      $region51: #{cnn_lstm_critic_forward.1} parent=5 // pred_region
        %s272 = ssub.s32 %s19, 1
        %p273 = scmp.lt.s32.totalorder %s24, 1
        %s274 = scalar_select %p273, %s24, 1
        %s275 = smul.addr %s274, 40
        %s276 = smul.addr %s275, 8
        %s277 = scalar_lea.vmem %s0, %s276
        %p278 = pneg %p45
        %p279 = pneg %p42
        %p280 = pneg %p66
        %p281 = pneg %p63
        %p282 = pneg %p87
        %p283 = pneg %p84
        %p284 = pneg %p108
        %p285 = pneg %p105
        %p286 = pneg %p129
        %p287 = pneg %p126
        %p288 = pneg %p150
        %p289 = pneg %p147
        %p290 = pneg %p171
        %p291 = pneg %p168
        %p292 = pneg %p192
        %p293 = pneg %p189
        %p294 = pneg %p218
        %p295 = pneg %p215
        %s296 = sand.u32 %s205, 1
        %s297 = scalar_lea.sflag [#allocation4], %s296
        %s298 = sand.u32 %s205, 1
        %s299 = scalar_lea.vmem [#allocation3], %s298
        %p300 = scmp.lt.s32.totalorder %s24, 1
        %s301 = scalar_select %p300, %s24, 1
        %s302 = smul.addr %s301, 40
        %s303 = smul.addr %s302, 8
        %s304 = scalar_lea.vmem %s0, %s303
        %v305 = vld [vmem:[%s1] sm:$0xff]
        %v306 = vld [vmem:[%s2] sm:$0xff]
        %v307 = vld [vmem:[%s304] sm:$0xff]
        %v308 = vld [vmem:[%s304 + $0x8] sm:$0xff]
        %v309 = vld [vmem:[%s304 + $0x10] sm:$0xff]
        %v310 = vld [vmem:[%s304 + $0x18] sm:$0xff]
        %v311 = vld [vmem:[%s304 + $0x20] sm:$0xf]
        %313 = vset.pattern.permute.xlu0 0
        %314 = vperm.xlu0 %313, %v306
        %v315 = vpop.permute.xlu0 %314
        %vm317 = vcmask 293888
        %v319 = vsel %vm317, %v305, 0
        %vm321 = vcmask 1043456
        %v323 = vsel %vm321, %v311, 0
        %325 = vmatpush.msra.mxu0 0.0
        %326 = vmatpush.msra.mxu0 0.0
        %327 = vmatpush.msra.mxu0 0.0
        %328 = vmatpush.msra.mxu0 0.0
        %329 = vmatpush.msra.mxu0 0.0
        %330 = vmatpush.msra.mxu0 0.0
        %331 = vmatpush.msra.mxu0 0.0
        %332 = vmatpush.msra.mxu0 0.0
        %333 = vmatpush.msra.mxu0 0.0
        %334 = vmatpush.msra.mxu0 0.0
        %335 = vmatpush.msra.mxu0 0.0
        %336 = vmatpush.msra.mxu0 %v323
        %337 = vmatpush.msra.mxu0 %v310
        %338 = vmatpush.msra.mxu0 %v309
        %339 = vmatpush.msra.mxu0 %v308
        %340 = vmatpush.msra.mxu0 %v307
        %341 = vmatmul.f32.gmra.mxu0 %v319
        %v342 = vpop.f32.mrf.mxu0
        %v343 = vadd.f32 %v315, %v342
        %344 = vdwg.mxu0
        %v345 = vmax.f32 %v343, 0.0
        %s346 = scalar_lea.vmem %s304, 40
        %v347 = vld [vmem:[%s346] sm:$0xff]
        %v348 = vld [vmem:[%s346 + $0x8] sm:$0xff]
        %v349 = vld [vmem:[%s346 + $0x10] sm:$0xff]
        %v350 = vld [vmem:[%s346 + $0x18] sm:$0xff]
        %v351 = vld [vmem:[%s346 + $0x20] sm:$0xf]
        %v353 = vsel %vm321, %v351, 0
        %355 = vmatpush.msra.mxu0 0.0
        %356 = vmatpush.msra.mxu0 0.0
        %357 = vmatpush.msra.mxu0 0.0
        %358 = vmatpush.msra.mxu0 0.0
        %359 = vmatpush.msra.mxu0 0.0
        %360 = vmatpush.msra.mxu0 0.0
        %361 = vmatpush.msra.mxu0 0.0
        %362 = vmatpush.msra.mxu0 0.0
        %363 = vmatpush.msra.mxu0 0.0
        %364 = vmatpush.msra.mxu0 0.0
        %365 = vmatpush.msra.mxu0 0.0
        %366 = vmatpush.msra.mxu0 %v353
        %367 = vmatpush.msra.mxu0 %v350
        %368 = vmatpush.msra.mxu0 %v349
        %369 = vmatpush.msra.mxu0 %v348
        %370 = vmatpush.msra.mxu0 %v347
        %371 = vmatmul.f32.gmra.mxu0 %v319
        %v372 = vpop.f32.mrf.mxu0
        %v373 = vadd.f32 %v315, %v372
        %374 = vdwg.mxu0
        %v375 = vmax.f32 %v373, 0.0
        %s376 = scalar_lea.vmem %s304, 80
        %v377 = vld [vmem:[%s376] sm:$0xff]
        %v378 = vld [vmem:[%s376 + $0x8] sm:$0xff]
        %v379 = vld [vmem:[%s376 + $0x10] sm:$0xff]
        %v380 = vld [vmem:[%s376 + $0x18] sm:$0xff]
        %v381 = vld [vmem:[%s376 + $0x20] sm:$0xf]
        %v383 = vsel %vm321, %v381, 0
        %385 = vmatpush.msra.mxu0 0.0
        %386 = vmatpush.msra.mxu0 0.0
        %387 = vmatpush.msra.mxu0 0.0
        %388 = vmatpush.msra.mxu0 0.0
        %389 = vmatpush.msra.mxu0 0.0
        %390 = vmatpush.msra.mxu0 0.0
        %391 = vmatpush.msra.mxu0 0.0
        %392 = vmatpush.msra.mxu0 0.0
        %393 = vmatpush.msra.mxu0 0.0
        %394 = vmatpush.msra.mxu0 0.0
        %395 = vmatpush.msra.mxu0 0.0
        %396 = vmatpush.msra.mxu0 %v383
        %397 = vmatpush.msra.mxu0 %v380
        %398 = vmatpush.msra.mxu0 %v379
        %399 = vmatpush.msra.mxu0 %v378
        %400 = vmatpush.msra.mxu0 %v377
        %401 = vmatmul.f32.gmra.mxu0 %v319
        %v402 = vpop.f32.mrf.mxu0
        %v403 = vadd.f32 %v315, %v402
        %404 = vdwg.mxu0
        %v405 = vmax.f32 %v403, 0.0
        %s406 = scalar_lea.vmem %s304, 120
        %v407 = vld [vmem:[%s406] sm:$0xff]
        %v408 = vld [vmem:[%s406 + $0x8] sm:$0xff]
        %v409 = vld [vmem:[%s406 + $0x10] sm:$0xff]
        %v410 = vld [vmem:[%s406 + $0x18] sm:$0xff]
        %v411 = vld [vmem:[%s406 + $0x20] sm:$0xf]
        %v413 = vsel %vm321, %v411, 0
        %415 = vmatpush.msra.mxu0 0.0
        %416 = vmatpush.msra.mxu0 0.0
        %417 = vmatpush.msra.mxu0 0.0
        %418 = vmatpush.msra.mxu0 0.0
        %419 = vmatpush.msra.mxu0 0.0
        %420 = vmatpush.msra.mxu0 0.0
        %421 = vmatpush.msra.mxu0 0.0
        %422 = vmatpush.msra.mxu0 0.0
        %423 = vmatpush.msra.mxu0 0.0
        %424 = vmatpush.msra.mxu0 0.0
        %425 = vmatpush.msra.mxu0 0.0
        %426 = vmatpush.msra.mxu0 %v413
        %427 = vmatpush.msra.mxu0 %v410
        %428 = vmatpush.msra.mxu0 %v409
        %429 = vmatpush.msra.mxu0 %v408
        %430 = vmatpush.msra.mxu0 %v407
        %431 = vmatmul.f32.gmra.mxu0 %v319
        %v432 = vpop.f32.mrf.mxu0
        %v433 = vadd.f32 %v315, %v432
        %434 = vdwg.mxu0
        %v435 = vmax.f32 %v433, 0.0
        %s436 = scalar_lea.vmem %s304, 160
        %v437 = vld [vmem:[%s436] sm:$0xff]
        %v438 = vld [vmem:[%s436 + $0x8] sm:$0xff]
        %v439 = vld [vmem:[%s436 + $0x10] sm:$0xff]
        %v440 = vld [vmem:[%s436 + $0x18] sm:$0xff]
        %v441 = vld [vmem:[%s436 + $0x20] sm:$0xf]
        %v443 = vsel %vm321, %v441, 0
        %445 = vmatpush.msra.mxu0 0.0
        %446 = vmatpush.msra.mxu0 0.0
        %447 = vmatpush.msra.mxu0 0.0
        %448 = vmatpush.msra.mxu0 0.0
        %449 = vmatpush.msra.mxu0 0.0
        %450 = vmatpush.msra.mxu0 0.0
        %451 = vmatpush.msra.mxu0 0.0
        %452 = vmatpush.msra.mxu0 0.0
        %453 = vmatpush.msra.mxu0 0.0
        %454 = vmatpush.msra.mxu0 0.0
        %455 = vmatpush.msra.mxu0 0.0
        %456 = vmatpush.msra.mxu0 %v443
        %457 = vmatpush.msra.mxu0 %v440
        %458 = vmatpush.msra.mxu0 %v439
        %459 = vmatpush.msra.mxu0 %v438
        %460 = vmatpush.msra.mxu0 %v437
        %461 = vmatmul.f32.gmra.mxu0 %v319
        %v462 = vpop.f32.mrf.mxu0
        %v463 = vadd.f32 %v315, %v462
        %464 = vdwg.mxu0
        %v465 = vmax.f32 %v463, 0.0
        %s466 = scalar_lea.vmem %s304, 200
        %v467 = vld [vmem:[%s466] sm:$0xff]
        %v468 = vld [vmem:[%s466 + $0x8] sm:$0xff]
        %v469 = vld [vmem:[%s466 + $0x10] sm:$0xff]
        %v470 = vld [vmem:[%s466 + $0x18] sm:$0xff]
        %v471 = vld [vmem:[%s466 + $0x20] sm:$0xf]
        %v473 = vsel %vm321, %v471, 0
        %475 = vmatpush.msra.mxu0 0.0
        %476 = vmatpush.msra.mxu0 0.0
        %477 = vmatpush.msra.mxu0 0.0
        %478 = vmatpush.msra.mxu0 0.0
        %479 = vmatpush.msra.mxu0 0.0
        %480 = vmatpush.msra.mxu0 0.0
        %481 = vmatpush.msra.mxu0 0.0
        %482 = vmatpush.msra.mxu0 0.0
        %483 = vmatpush.msra.mxu0 0.0
        %484 = vmatpush.msra.mxu0 0.0
        %485 = vmatpush.msra.mxu0 0.0
        %486 = vmatpush.msra.mxu0 %v473
        %487 = vmatpush.msra.mxu0 %v470
        %488 = vmatpush.msra.mxu0 %v469
        %489 = vmatpush.msra.mxu0 %v468
        %490 = vmatpush.msra.mxu0 %v467
        %491 = vmatmul.f32.gmra.mxu0 %v319
        %v492 = vpop.f32.mrf.mxu0
        %v493 = vadd.f32 %v315, %v492
        %494 = vdwg.mxu0
        %v495 = vmax.f32 %v493, 0.0
        %s496 = scalar_lea.vmem %s304, 240
        %v497 = vld [vmem:[%s496] sm:$0xff]
        %v498 = vld [vmem:[%s496 + $0x8] sm:$0xff]
        %v499 = vld [vmem:[%s496 + $0x10] sm:$0xff]
        %v500 = vld [vmem:[%s496 + $0x18] sm:$0xff]
        %v501 = vld [vmem:[%s496 + $0x20] sm:$0xf]
        %v503 = vsel %vm321, %v501, 0
        %505 = vmatpush.msra.mxu0 0.0
        %506 = vmatpush.msra.mxu0 0.0
        %507 = vmatpush.msra.mxu0 0.0
        %508 = vmatpush.msra.mxu0 0.0
        %509 = vmatpush.msra.mxu0 0.0
        %510 = vmatpush.msra.mxu0 0.0
        %511 = vmatpush.msra.mxu0 0.0
        %512 = vmatpush.msra.mxu0 0.0
        %513 = vmatpush.msra.mxu0 0.0
        %514 = vmatpush.msra.mxu0 0.0
        %515 = vmatpush.msra.mxu0 0.0
        %516 = vmatpush.msra.mxu0 %v503
        %517 = vmatpush.msra.mxu0 %v500
        %518 = vmatpush.msra.mxu0 %v499
        %519 = vmatpush.msra.mxu0 %v498
        %520 = vmatpush.msra.mxu0 %v497
        %521 = vmatmul.f32.gmra.mxu0 %v319
        %v522 = vpop.f32.mrf.mxu0
        %v523 = vadd.f32 %v315, %v522
        %524 = vdwg.mxu0
        %v525 = vmax.f32 %v523, 0.0
        %s526 = scalar_lea.vmem %s304, 280
        %v527 = vld [vmem:[%s526] sm:$0xff]
        %v528 = vld [vmem:[%s526 + $0x8] sm:$0xff]
        %v529 = vld [vmem:[%s526 + $0x10] sm:$0xff]
        %v530 = vld [vmem:[%s526 + $0x18] sm:$0xff]
        %v531 = vld [vmem:[%s526 + $0x20] sm:$0xf]
        %v533 = vsel %vm321, %v531, 0
        %535 = vmatpush.msra.mxu0 0.0
        %536 = vmatpush.msra.mxu0 0.0
        %537 = vmatpush.msra.mxu0 0.0
        %538 = vmatpush.msra.mxu0 0.0
        %539 = vmatpush.msra.mxu0 0.0
        %540 = vmatpush.msra.mxu0 0.0
        %541 = vmatpush.msra.mxu0 0.0
        %542 = vmatpush.msra.mxu0 0.0
        %543 = vmatpush.msra.mxu0 0.0
        %544 = vmatpush.msra.mxu0 0.0
        %545 = vmatpush.msra.mxu0 0.0
        %546 = vmatpush.msra.mxu0 %v533
        %547 = vmatpush.msra.mxu0 %v530
        %548 = vmatpush.msra.mxu0 %v529
        %549 = vmatpush.msra.mxu0 %v528
        %550 = vmatpush.msra.mxu0 %v527
        %551 = vmatmul.f32.gmra.mxu0 %v319
        %v552 = vpop.f32.mrf.mxu0
        %v553 = vadd.f32 %v315, %v552
        %554 = vdwg.mxu0
        %v555 = vmax.f32 %v553, 0.0
        %v556 = vld [vmem:[%s3] sm:$0xff]
        %v557 = vld [vmem:[%s3 + $0x8] sm:$0xff]
        %v558 = vld [vmem:[%s3 + $0x10] sm:$0xff]
        %v559 = vld [vmem:[%s3 + $0x18] sm:$0xff]
        %v560 = vld [vmem:[%s3 + $0x20] sm:$0xff]
        %v561 = vld [vmem:[%s3 + $0x28] sm:$0xff]
        %v562 = vld [vmem:[%s3 + $0x30] sm:$0xff]
        %v563 = vld [vmem:[%s3 + $0x38] sm:$0xff]
        %s564 = scalar_lea.vmem %s3, 64
        %v565 = vld [vmem:[%s564] sm:$0xff]
        %v566 = vld [vmem:[%s564 + $0x8] sm:$0xff]
        %v567 = vld [vmem:[%s564 + $0x10] sm:$0xff]
        %v568 = vld [vmem:[%s564 + $0x18] sm:$0xff]
        %v569 = vld [vmem:[%s564 + $0x20] sm:$0xff]
        %v570 = vld [vmem:[%s564 + $0x28] sm:$0xff]
        %v571 = vld [vmem:[%s564 + $0x30] sm:$0xff]
        %v572 = vld [vmem:[%s564 + $0x38] sm:$0xff]
        %v581 = vrot.slane %v345, 1
        %vm582 = vcmask 1041409
        %v583 = vsel %vm582, %v375, %v581
        %v584 = vrot.slane %v405, 7
        %vm585 = vcmask 1042434
        %v586 = vsel %vm585, %v584, %v583
        %v587 = vrot.slane %v435, 6
        %vm588 = vcmask 1043459
        %v589 = vsel %vm588, %v587, %v586
        %v590 = vrot.slane %v465, 5
        %vm591 = vcmask 1044484
        %v592 = vsel %vm591, %v590, %v589
        %v593 = vrot.slane %v495, 4
        %vm594 = vcmask 1045509
        %v595 = vsel %vm594, %v593, %v592
        %v596 = vrot.slane %v525, 3
        %vm597 = vcmask 1046534
        %v598 = vsel %vm597, %v596, %v595
        %v599 = vrot.slane %v555, 2
        %vm600 = vcmask 1047559
        %v601 = vsel %vm600, %v599, %v598
        %vm602 = vcmask 523264
        %v603 = vsel %vm602, %v601, 0
        %605 = vmatpush.msra.mxu0 0.0
        %606 = vmatpush.msra.mxu0 0.0
        %607 = vmatpush.msra.mxu0 0.0
        %608 = vmatpush.msra.mxu0 0.0
        %609 = vmatpush.msra.mxu0 0.0
        %610 = vmatpush.msra.mxu0 0.0
        %611 = vmatpush.msra.mxu0 0.0
        %612 = vmatpush.msra.mxu0 0.0
        %613 = vmatpush.msra.mxu0 %v572
        %614 = vmatpush.msra.mxu0 %v571
        %615 = vmatpush.msra.mxu0 %v570
        %616 = vmatpush.msra.mxu0 %v569
        %617 = vmatpush.msra.mxu0 %v568
        %618 = vmatpush.msra.mxu0 %v567
        %619 = vmatpush.msra.mxu0 %v566
        %620 = vmatpush.msra.mxu0 %v565
        %621 = vmatmul.f32.gmra.mxu0 %v603
        %v622 = vpop.f32.mrf.mxu0
        %v623 = vadd.f32 0.0, %v622
        %624 = vdwg.mxu0
        %v625 = vrot.slane %v375, 7
        %v626 = vsel %vm582, %v625, %v345
        %v627 = vrot.slane %v405, 6
        %v628 = vsel %vm585, %v627, %v626
        %v629 = vrot.slane %v435, 5
        %v630 = vsel %vm588, %v629, %v628
        %v631 = vrot.slane %v465, 4
        %v632 = vsel %vm591, %v631, %v630
        %v633 = vrot.slane %v495, 3
        %v634 = vsel %vm594, %v633, %v632
        %v635 = vrot.slane %v525, 2
        %v636 = vsel %vm597, %v635, %v634
        %v637 = vrot.slane %v555, 1
        %v638 = vsel %vm600, %v637, %v636
        %v639 = vsel %vm602, %v638, 0
        %641 = vmatpush.msra.mxu0 0.0
        %642 = vmatpush.msra.mxu0 0.0
        %643 = vmatpush.msra.mxu0 0.0
        %644 = vmatpush.msra.mxu0 0.0
        %645 = vmatpush.msra.mxu0 0.0
        %646 = vmatpush.msra.mxu0 0.0
        %647 = vmatpush.msra.mxu0 0.0
        %648 = vmatpush.msra.mxu0 0.0
        %649 = vmatpush.msra.mxu0 %v563
        %650 = vmatpush.msra.mxu0 %v562
        %651 = vmatpush.msra.mxu0 %v561
        %652 = vmatpush.msra.mxu0 %v560
        %653 = vmatpush.msra.mxu0 %v559
        %654 = vmatpush.msra.mxu0 %v558
        %655 = vmatpush.msra.mxu0 %v557
        %656 = vmatpush.msra.mxu0 %v556
        %657 = vmatmul.f32.gmra.mxu0 %v639
        %v658 = vpop.f32.mrf.mxu0
        %v659 = vadd.f32 %v623, %v658
        %660 = vdwg.mxu0
        %s661 = scalar_lea.vmem %s3, 128
        %v662 = vld [vmem:[%s661] sm:$0xff]
        %v663 = vld [vmem:[%s661 + $0x8] sm:$0xff]
        %v664 = vld [vmem:[%s661 + $0x10] sm:$0xff]
        %v665 = vld [vmem:[%s661 + $0x18] sm:$0xff]
        %v666 = vld [vmem:[%s661 + $0x20] sm:$0xff]
        %v667 = vld [vmem:[%s661 + $0x28] sm:$0xff]
        %v668 = vld [vmem:[%s661 + $0x30] sm:$0xff]
        %v669 = vld [vmem:[%s661 + $0x38] sm:$0xff]
        %v670 = vrot.slane %v345, 2
        %v671 = vrot.slane %v375, 1
        %v672 = vsel %vm582, %v671, %v670
        %v673 = vsel %vm585, %v405, %v672
        %v674 = vrot.slane %v435, 7
        %v675 = vsel %vm588, %v674, %v673
        %v676 = vrot.slane %v465, 6
        %v677 = vsel %vm591, %v676, %v675
        %v678 = vrot.slane %v495, 5
        %v679 = vsel %vm594, %v678, %v677
        %v680 = vrot.slane %v525, 4
        %v681 = vsel %vm597, %v680, %v679
        %v682 = vrot.slane %v555, 3
        %v683 = vsel %vm600, %v682, %v681
        %v684 = vsel %vm602, %v683, 0
        %686 = vmatpush.msra.mxu0 0.0
        %687 = vmatpush.msra.mxu0 0.0
        %688 = vmatpush.msra.mxu0 0.0
        %689 = vmatpush.msra.mxu0 0.0
        %690 = vmatpush.msra.mxu0 0.0
        %691 = vmatpush.msra.mxu0 0.0
        %692 = vmatpush.msra.mxu0 0.0
        %693 = vmatpush.msra.mxu0 0.0
        %694 = vmatpush.msra.mxu0 %v669
        %695 = vmatpush.msra.mxu0 %v668
        %696 = vmatpush.msra.mxu0 %v667
        %697 = vmatpush.msra.mxu0 %v666
        %698 = vmatpush.msra.mxu0 %v665
        %699 = vmatpush.msra.mxu0 %v664
        %700 = vmatpush.msra.mxu0 %v663
        %701 = vmatpush.msra.mxu0 %v662
        %702 = vmatmul.f32.gmra.mxu0 %v684
        %v703 = vpop.f32.mrf.mxu0
        %v704 = vadd.f32 0.0, %v703
        %705 = vdwg.mxu0
        %v706 = vadd.f32 %v659, %v704
        %s707 = scalar_lea.vmem %s3, 192
        %v708 = vld [vmem:[%s707] sm:$0xff]
        %v709 = vld [vmem:[%s707 + $0x8] sm:$0xff]
        %v710 = vld [vmem:[%s707 + $0x10] sm:$0xff]
        %v711 = vld [vmem:[%s707 + $0x18] sm:$0xff]
        %v712 = vld [vmem:[%s707 + $0x20] sm:$0xff]
        %v713 = vld [vmem:[%s707 + $0x28] sm:$0xff]
        %v714 = vld [vmem:[%s707 + $0x30] sm:$0xff]
        %v715 = vld [vmem:[%s707 + $0x38] sm:$0xff]
        %v716 = vrot.slane %v345, 3
        %v717 = vrot.slane %v375, 2
        %v718 = vsel %vm582, %v717, %v716
        %v719 = vrot.slane %v405, 1
        %v720 = vsel %vm585, %v719, %v718
        %v721 = vsel %vm588, %v435, %v720
        %v722 = vrot.slane %v465, 7
        %v723 = vsel %vm591, %v722, %v721
        %v724 = vrot.slane %v495, 6
        %v725 = vsel %vm594, %v724, %v723
        %v726 = vrot.slane %v525, 5
        %v727 = vsel %vm597, %v726, %v725
        %v728 = vrot.slane %v555, 4
        %v729 = vsel %vm600, %v728, %v727
        %v730 = vsel %vm602, %v729, 0
        %732 = vmatpush.msra.mxu0 0.0
        %733 = vmatpush.msra.mxu0 0.0
        %734 = vmatpush.msra.mxu0 0.0
        %735 = vmatpush.msra.mxu0 0.0
        %736 = vmatpush.msra.mxu0 0.0
        %737 = vmatpush.msra.mxu0 0.0
        %738 = vmatpush.msra.mxu0 0.0
        %739 = vmatpush.msra.mxu0 0.0
        %740 = vmatpush.msra.mxu0 %v715
        %741 = vmatpush.msra.mxu0 %v714
        %742 = vmatpush.msra.mxu0 %v713
        %743 = vmatpush.msra.mxu0 %v712
        %744 = vmatpush.msra.mxu0 %v711
        %745 = vmatpush.msra.mxu0 %v710
        %746 = vmatpush.msra.mxu0 %v709
        %747 = vmatpush.msra.mxu0 %v708
        %748 = vmatmul.f32.gmra.mxu0 %v730
        %v749 = vpop.f32.mrf.mxu0
        %v750 = vadd.f32 0.0, %v749
        %751 = vdwg.mxu0
        %v752 = vadd.f32 %v706, %v750
        %s753 = scalar_lea.vmem %s3, 256
        %v754 = vld [vmem:[%s753] sm:$0xff]
        %v755 = vld [vmem:[%s753 + $0x8] sm:$0xff]
        %v756 = vld [vmem:[%s753 + $0x10] sm:$0xff]
        %v757 = vld [vmem:[%s753 + $0x18] sm:$0xff]
        %v758 = vld [vmem:[%s753 + $0x20] sm:$0xff]
        %v759 = vld [vmem:[%s753 + $0x28] sm:$0xff]
        %v760 = vld [vmem:[%s753 + $0x30] sm:$0xff]
        %v761 = vld [vmem:[%s753 + $0x38] sm:$0xff]
        %v762 = vrot.slane %v345, 4
        %v763 = vrot.slane %v375, 3
        %v764 = vsel %vm582, %v763, %v762
        %v765 = vrot.slane %v405, 2
        %v766 = vsel %vm585, %v765, %v764
        %v767 = vrot.slane %v435, 1
        %v768 = vsel %vm588, %v767, %v766
        %v769 = vsel %vm591, %v465, %v768
        %v770 = vrot.slane %v495, 7
        %v771 = vsel %vm594, %v770, %v769
        %v772 = vrot.slane %v525, 6
        %v773 = vsel %vm597, %v772, %v771
        %v774 = vrot.slane %v555, 5
        %v775 = vsel %vm600, %v774, %v773
        %v776 = vsel %vm602, %v775, 0
        %778 = vmatpush.msra.mxu0 0.0
        %779 = vmatpush.msra.mxu0 0.0
        %780 = vmatpush.msra.mxu0 0.0
        %781 = vmatpush.msra.mxu0 0.0
        %782 = vmatpush.msra.mxu0 0.0
        %783 = vmatpush.msra.mxu0 0.0
        %784 = vmatpush.msra.mxu0 0.0
        %785 = vmatpush.msra.mxu0 0.0
        %786 = vmatpush.msra.mxu0 %v761
        %787 = vmatpush.msra.mxu0 %v760
        %788 = vmatpush.msra.mxu0 %v759
        %789 = vmatpush.msra.mxu0 %v758
        %790 = vmatpush.msra.mxu0 %v757
        %791 = vmatpush.msra.mxu0 %v756
        %792 = vmatpush.msra.mxu0 %v755
        %793 = vmatpush.msra.mxu0 %v754
        %794 = vmatmul.f32.gmra.mxu0 %v776
        %v795 = vpop.f32.mrf.mxu0
        %v796 = vadd.f32 0.0, %v795
        %797 = vdwg.mxu0
        %v798 = vadd.f32 %v752, %v796
        %s799 = scalar_lea.vmem %s3, 320
        %v800 = vld [vmem:[%s799] sm:$0xff]
        %v801 = vld [vmem:[%s799 + $0x8] sm:$0xff]
        %v802 = vld [vmem:[%s799 + $0x10] sm:$0xff]
        %v803 = vld [vmem:[%s799 + $0x18] sm:$0xff]
        %v804 = vld [vmem:[%s799 + $0x20] sm:$0xff]
        %v805 = vld [vmem:[%s799 + $0x28] sm:$0xff]
        %v806 = vld [vmem:[%s799 + $0x30] sm:$0xff]
        %v807 = vld [vmem:[%s799 + $0x38] sm:$0xff]
        %v808 = vrot.slane %v345, 5
        %v809 = vrot.slane %v375, 4
        %v810 = vsel %vm582, %v809, %v808
        %v811 = vrot.slane %v405, 3
        %v812 = vsel %vm585, %v811, %v810
        %v813 = vrot.slane %v435, 2
        %v814 = vsel %vm588, %v813, %v812
        %v815 = vrot.slane %v465, 1
        %v816 = vsel %vm591, %v815, %v814
        %v817 = vsel %vm594, %v495, %v816
        %v818 = vrot.slane %v525, 7
        %v819 = vsel %vm597, %v818, %v817
        %v820 = vrot.slane %v555, 6
        %v821 = vsel %vm600, %v820, %v819
        %v822 = vsel %vm602, %v821, 0
        %824 = vmatpush.msra.mxu0 0.0
        %825 = vmatpush.msra.mxu0 0.0
        %826 = vmatpush.msra.mxu0 0.0
        %827 = vmatpush.msra.mxu0 0.0
        %828 = vmatpush.msra.mxu0 0.0
        %829 = vmatpush.msra.mxu0 0.0
        %830 = vmatpush.msra.mxu0 0.0
        %831 = vmatpush.msra.mxu0 0.0
        %832 = vmatpush.msra.mxu0 %v807
        %833 = vmatpush.msra.mxu0 %v806
        %834 = vmatpush.msra.mxu0 %v805
        %835 = vmatpush.msra.mxu0 %v804
        %836 = vmatpush.msra.mxu0 %v803
        %837 = vmatpush.msra.mxu0 %v802
        %838 = vmatpush.msra.mxu0 %v801
        %839 = vmatpush.msra.mxu0 %v800
        %840 = vmatmul.f32.gmra.mxu0 %v822
        %v841 = vpop.f32.mrf.mxu0
        %v842 = vadd.f32 0.0, %v841
        %843 = vdwg.mxu0
        %v844 = vadd.f32 %v798, %v842
        %s845 = scalar_lea.vmem %s3, 384
        %v846 = vld [vmem:[%s845] sm:$0xff]
        %v847 = vld [vmem:[%s845 + $0x8] sm:$0xff]
        %v848 = vld [vmem:[%s845 + $0x10] sm:$0xff]
        %v849 = vld [vmem:[%s845 + $0x18] sm:$0xff]
        %v850 = vld [vmem:[%s845 + $0x20] sm:$0xff]
        %v851 = vld [vmem:[%s845 + $0x28] sm:$0xff]
        %v852 = vld [vmem:[%s845 + $0x30] sm:$0xff]
        %v853 = vld [vmem:[%s845 + $0x38] sm:$0xff]
        %v854 = vrot.slane %v345, 6
        %v855 = vrot.slane %v375, 5
        %v856 = vsel %vm582, %v855, %v854
        %v857 = vrot.slane %v405, 4
        %v858 = vsel %vm585, %v857, %v856
        %v859 = vrot.slane %v435, 3
        %v860 = vsel %vm588, %v859, %v858
        %v861 = vrot.slane %v465, 2
        %v862 = vsel %vm591, %v861, %v860
        %v863 = vrot.slane %v495, 1
        %v864 = vsel %vm594, %v863, %v862
        %v865 = vsel %vm597, %v525, %v864
        %v866 = vrot.slane %v555, 7
        %v867 = vsel %vm600, %v866, %v865
        %v868 = vsel %vm602, %v867, 0
        %870 = vmatpush.msra.mxu0 0.0
        %871 = vmatpush.msra.mxu0 0.0
        %872 = vmatpush.msra.mxu0 0.0
        %873 = vmatpush.msra.mxu0 0.0
        %874 = vmatpush.msra.mxu0 0.0
        %875 = vmatpush.msra.mxu0 0.0
        %876 = vmatpush.msra.mxu0 0.0
        %877 = vmatpush.msra.mxu0 0.0
        %878 = vmatpush.msra.mxu0 %v853
        %879 = vmatpush.msra.mxu0 %v852
        %880 = vmatpush.msra.mxu0 %v851
        %881 = vmatpush.msra.mxu0 %v850
        %882 = vmatpush.msra.mxu0 %v849
        %883 = vmatpush.msra.mxu0 %v848
        %884 = vmatpush.msra.mxu0 %v847
        %885 = vmatpush.msra.mxu0 %v846
        %886 = vmatmul.f32.gmra.mxu0 %v868
        %v887 = vpop.f32.mrf.mxu0
        %v888 = vadd.f32 0.0, %v887
        %889 = vdwg.mxu0
        %v890 = vadd.f32 %v844, %v888
        %s891 = scalar_lea.vmem %s3, 448
        %v892 = vld [vmem:[%s891] sm:$0xff]
        %v893 = vld [vmem:[%s891 + $0x8] sm:$0xff]
        %v894 = vld [vmem:[%s891 + $0x10] sm:$0xff]
        %v895 = vld [vmem:[%s891 + $0x18] sm:$0xff]
        %v896 = vld [vmem:[%s891 + $0x20] sm:$0xff]
        %v897 = vld [vmem:[%s891 + $0x28] sm:$0xff]
        %v898 = vld [vmem:[%s891 + $0x30] sm:$0xff]
        %v899 = vld [vmem:[%s891 + $0x38] sm:$0xff]
        %v900 = vrot.slane %v345, 7
        %v901 = vrot.slane %v375, 6
        %v902 = vsel %vm582, %v901, %v900
        %v903 = vrot.slane %v405, 5
        %v904 = vsel %vm585, %v903, %v902
        %v905 = vrot.slane %v435, 4
        %v906 = vsel %vm588, %v905, %v904
        %v907 = vrot.slane %v465, 3
        %v908 = vsel %vm591, %v907, %v906
        %v909 = vrot.slane %v495, 2
        %v910 = vsel %vm594, %v909, %v908
        %v911 = vrot.slane %v525, 1
        %v912 = vsel %vm597, %v911, %v910
        %v913 = vsel %vm600, %v555, %v912
        %v914 = vsel %vm602, %v913, 0
        %916 = vmatpush.msra.mxu0 0.0
        %917 = vmatpush.msra.mxu0 0.0
        %918 = vmatpush.msra.mxu0 0.0
        %919 = vmatpush.msra.mxu0 0.0
        %920 = vmatpush.msra.mxu0 0.0
        %921 = vmatpush.msra.mxu0 0.0
        %922 = vmatpush.msra.mxu0 0.0
        %923 = vmatpush.msra.mxu0 0.0
        %924 = vmatpush.msra.mxu0 %v899
        %925 = vmatpush.msra.mxu0 %v898
        %926 = vmatpush.msra.mxu0 %v897
        %927 = vmatpush.msra.mxu0 %v896
        %928 = vmatpush.msra.mxu0 %v895
        %929 = vmatpush.msra.mxu0 %v894
        %930 = vmatpush.msra.mxu0 %v893
        %931 = vmatpush.msra.mxu0 %v892
        %932 = vmatmul.f32.gmra.mxu0 %v914
        %v933 = vpop.f32.mrf.mxu0
        %v934 = vadd.f32 0.0, %v933
        %935 = vdwg.mxu0
        %v936 = vadd.f32 %v890, %v934
        %v937 = vld [vmem:[%s4] sm:$0x1]
        %v939 = vperm.slane %v937, 0
        %v941 = vadd.f32 %v936, %v939
        %v942 = vld [vmem:[%s5] sm:$0xff]
        %v943 = vld [vmem:[%s5 + $0x8] sm:$0xff]
        %v944 = vld [vmem:[%s5 + $0x10] sm:$0xff]
        %v945 = vld [vmem:[%s5 + $0x18] sm:$0xff]
        %v946 = vld [vmem:[%s6] sm:$0x1]
        %vm947 = vcmask 261120
        %v949 = vsel %vm947, 0.0, 0
        %951 = vmatpush.msra.mxu0 0.0
        %952 = vmatpush.msra.mxu0 0.0
        %953 = vmatpush.msra.mxu0 0.0
        %954 = vmatpush.msra.mxu0 0.0
        %955 = vmatpush.msra.mxu0 0.0
        %956 = vmatpush.msra.mxu0 0.0
        %957 = vmatpush.msra.mxu0 0.0
        %958 = vmatpush.msra.mxu0 0.0
        %959 = vmatpush.msra.mxu0 0.0
        %960 = vmatpush.msra.mxu0 0.0
        %961 = vmatpush.msra.mxu0 0.0
        %962 = vmatpush.msra.mxu0 0.0
        %963 = vmatpush.msra.mxu0 %v945
        %964 = vmatpush.msra.mxu0 %v944
        %965 = vmatpush.msra.mxu0 %v943
        %966 = vmatpush.msra.mxu0 %v942
        %967 = vmatmul.f32.gmra.mxu0 %v949
        %v968 = vpop.f32.mrf.mxu0
        %v969 = vadd.f32 0.0, %v968
        %970 = vdwg.mxu0
        %v971 = vadd.f32 %v941, %v969
        %v972 = vxor.u32 %v971, 2147483648
        %v973 = vmul.f32 %v972, 1.442695
        %v974 = vpow.pop %v973
        %v975 = vadd.f32 %v974, 1.0
        %v976 = vrcp.pop %v975
        %v977 = vmul.f32 %v975, %v976
        %v978 = vsub.f32 1.0, %v977
        %v979 = vmul.f32 %v976, %v978
        %v980 = vadd.f32 %v976, %v979
        %vm981 = vweird.f32 %v975
        %vm982 = vweird.f32 %v976
        %vm983 = vmor %vm981, %vm982
        %v984 = vsel %vm983, %v976, %v980
        %v985 = vand.u32 2147483647, %v975
        %vm986 = vcmp.eq.f32.partialorder %v985, 8.507059e+37
        %v987 = vand.u32 %v975, 2147483648
        %v988 = vor.u32 1.1754944e-38, %v987
        %v989 = vsel %vm986, %v988, %v984
        %v990 = vmul.f32 1.0, %v989
        %v991 = vtanh.pop %v971
        %v992 = vmul.f32 %v990, 0.0
        %994 = vrot.lane.b32.xlu0 %v991, 64
        %v995 = vpop.permute.xlu0 %994
        %v997 = vmul.f32 %v990, %v995
        %999 = vrot.lane.b32.xlu0 %v997, 32
        %v1000 = vpop.permute.xlu0 %999
        %v1002 = vadd.f32 %v992, %v1000
        %v1003 = vtanh.pop %v1002
        %1005 = vrot.lane.b32.xlu0 %v1003, 64
        %v1006 = vpop.permute.xlu0 %1005
        %v1008 = vmul.f32 %v990, %v1006
        %v1010 = vperm.slane %v946, 0
        %1011 = vrot.lane.b32.xlu0 %v1010, 96
        %v1012 = vpop.permute.xlu0 %1011
        %v1014 = vmul.f32 %v1008, %v1012
        %1016 = vrot.lane.b32.xlu0 %v1014, 32
        %v1017 = vpop.permute.xlu0 %1016
        %vm1019 = vcmask 253952
        %v1020 = vsel %vm1019, %v1017, 0.0
        %1021 = vadd.xlane.f32.xlu0 %v1020
        %v1022 = vpop.xlane.xlu0 %1021
        %1024 = vrot.lane.b32.xlu0 %v1008, 32
        %v1025 = vpop.permute.xlu0 %1024
        %v1026 = vsel %vm947, %v1025, 0
        %1028 = vmatpush.msra.mxu0 0.0
        %1029 = vmatpush.msra.mxu0 0.0
        %1030 = vmatpush.msra.mxu0 0.0
        %1031 = vmatpush.msra.mxu0 0.0
        %1032 = vmatpush.msra.mxu0 0.0
        %1033 = vmatpush.msra.mxu0 0.0
        %1034 = vmatpush.msra.mxu0 0.0
        %1035 = vmatpush.msra.mxu0 0.0
        %1036 = vmatpush.msra.mxu0 0.0
        %1037 = vmatpush.msra.mxu0 0.0
        %1038 = vmatpush.msra.mxu0 0.0
        %1039 = vmatpush.msra.mxu0 0.0
        %1040 = vmatpush.msra.mxu0 %v945
        %1041 = vmatpush.msra.mxu0 %v944
        %1042 = vmatpush.msra.mxu0 %v943
        %1043 = vmatpush.msra.mxu0 %v942
        %1044 = vmatmul.f32.gmra.mxu0 %v1026
        %v1045 = vpop.f32.mrf.mxu0
        %v1046 = vadd.f32 0.0, %v1045
        %1047 = vdwg.mxu0
        %v1049 = vrot.slane %v1046, 7
        %v1051 = vadd.f32 %v941, %v1049
        %v1052 = vxor.u32 %v1051, 2147483648
        %v1053 = vmul.f32 %v1052, 1.442695
        %v1054 = vpow.pop %v1053
        %v1055 = vadd.f32 %v1054, 1.0
        %v1056 = vrcp.pop %v1055
        %v1057 = vmul.f32 %v1055, %v1056
        %v1058 = vsub.f32 1.0, %v1057
        %v1059 = vmul.f32 %v1056, %v1058
        %v1060 = vadd.f32 %v1056, %v1059
        %vm1061 = vweird.f32 %v1055
        %vm1062 = vweird.f32 %v1056
        %vm1063 = vmor %vm1061, %vm1062
        %v1064 = vsel %vm1063, %v1056, %v1060
        %v1065 = vand.u32 2147483647, %v1055
        %vm1066 = vcmp.eq.f32.partialorder %v1065, 8.507059e+37
        %v1067 = vand.u32 %v1055, 2147483648
        %v1068 = vor.u32 1.1754944e-38, %v1067
        %v1069 = vsel %vm1066, %v1068, %v1064
        %v1070 = vmul.f32 1.0, %v1069
        %v1071 = vtanh.pop %v1051
        %v1073 = vrot.slane %v1002, 7
        %v1075 = vmul.f32 %v1070, %v1073
        %1077 = vrot.lane.b32.xlu0 %v1071, 64
        %v1078 = vpop.permute.xlu0 %1077
        %v1080 = vmul.f32 %v1070, %v1078
        %1082 = vrot.lane.b32.xlu0 %v1080, 32
        %v1083 = vpop.permute.xlu0 %1082
        %v1085 = vadd.f32 %v1075, %v1083
        %v1086 = vtanh.pop %v1085
        %1088 = vrot.lane.b32.xlu0 %v1086, 64
        %v1089 = vpop.permute.xlu0 %1088
        %v1091 = vmul.f32 %v1070, %v1089
        %v1092 = vmul.f32 %v1091, %v1012
        %1094 = vrot.lane.b32.xlu0 %v1092, 32
        %v1095 = vpop.permute.xlu0 %1094
        %vm1097 = vcmask 254977
        %v1098 = vsel %vm1097, %v1095, 0.0
        %1099 = vadd.xlane.f32.xlu0 %v1098
        %v1100 = vpop.xlane.xlu0 %1099
        %v1102 = vrot.slane %v1091, 1
        %1103 = vrot.lane.b32.xlu0 %v1102, 32
        %v1104 = vpop.permute.xlu0 %1103
        %v1105 = vsel %vm947, %v1104, 0
        %1107 = vmatpush.msra.mxu0 0.0
        %1108 = vmatpush.msra.mxu0 0.0
        %1109 = vmatpush.msra.mxu0 0.0
        %1110 = vmatpush.msra.mxu0 0.0
        %1111 = vmatpush.msra.mxu0 0.0
        %1112 = vmatpush.msra.mxu0 0.0
        %1113 = vmatpush.msra.mxu0 0.0
        %1114 = vmatpush.msra.mxu0 0.0
        %1115 = vmatpush.msra.mxu0 0.0
        %1116 = vmatpush.msra.mxu0 0.0
        %1117 = vmatpush.msra.mxu0 0.0
        %1118 = vmatpush.msra.mxu0 0.0
        %1119 = vmatpush.msra.mxu0 %v945
        %1120 = vmatpush.msra.mxu0 %v944
        %1121 = vmatpush.msra.mxu0 %v943
        %1122 = vmatpush.msra.mxu0 %v942
        %1123 = vmatmul.f32.gmra.mxu0 %v1105
        %v1124 = vpop.f32.mrf.mxu0
        %v1125 = vadd.f32 0.0, %v1124
        %1126 = vdwg.mxu0
        %v1128 = vrot.slane %v1125, 6
        %v1130 = vadd.f32 %v941, %v1128
        %v1131 = vxor.u32 %v1130, 2147483648
        %v1132 = vmul.f32 %v1131, 1.442695
        %v1133 = vpow.pop %v1132
        %v1134 = vadd.f32 %v1133, 1.0
        %v1135 = vrcp.pop %v1134
        %v1136 = vmul.f32 %v1134, %v1135
        %v1137 = vsub.f32 1.0, %v1136
        %v1138 = vmul.f32 %v1135, %v1137
        %v1139 = vadd.f32 %v1135, %v1138
        %vm1140 = vweird.f32 %v1134
        %vm1141 = vweird.f32 %v1135
        %vm1142 = vmor %vm1140, %vm1141
        %v1143 = vsel %vm1142, %v1135, %v1139
        %v1144 = vand.u32 2147483647, %v1134
        %vm1145 = vcmp.eq.f32.partialorder %v1144, 8.507059e+37
        %v1146 = vand.u32 %v1134, 2147483648
        %v1147 = vor.u32 1.1754944e-38, %v1146
        %v1148 = vsel %vm1145, %v1147, %v1143
        %v1149 = vmul.f32 1.0, %v1148
        %v1150 = vtanh.pop %v1130
        %v1152 = vrot.slane %v1085, 7
        %v1154 = vmul.f32 %v1149, %v1152
        %1156 = vrot.lane.b32.xlu0 %v1150, 64
        %v1157 = vpop.permute.xlu0 %1156
        %v1159 = vmul.f32 %v1149, %v1157
        %1161 = vrot.lane.b32.xlu0 %v1159, 32
        %v1162 = vpop.permute.xlu0 %1161
        %v1164 = vadd.f32 %v1154, %v1162
        %v1165 = vtanh.pop %v1164
        %1167 = vrot.lane.b32.xlu0 %v1165, 64
        %v1168 = vpop.permute.xlu0 %1167
        %v1170 = vmul.f32 %v1149, %v1168
        %v1171 = vmul.f32 %v1170, %v1012
        %1173 = vrot.lane.b32.xlu0 %v1171, 32
        %v1174 = vpop.permute.xlu0 %1173
        %vm1176 = vcmask 256002
        %v1177 = vsel %vm1176, %v1174, 0.0
        %1178 = vadd.xlane.f32.xlu0 %v1177
        %v1179 = vpop.xlane.xlu0 %1178
        %v1181 = vrot.slane %v1170, 2
        %1182 = vrot.lane.b32.xlu0 %v1181, 32
        %v1183 = vpop.permute.xlu0 %1182
        %v1184 = vsel %vm947, %v1183, 0
        %1186 = vmatpush.msra.mxu0 0.0
        %1187 = vmatpush.msra.mxu0 0.0
        %1188 = vmatpush.msra.mxu0 0.0
        %1189 = vmatpush.msra.mxu0 0.0
        %1190 = vmatpush.msra.mxu0 0.0
        %1191 = vmatpush.msra.mxu0 0.0
        %1192 = vmatpush.msra.mxu0 0.0
        %1193 = vmatpush.msra.mxu0 0.0
        %1194 = vmatpush.msra.mxu0 0.0
        %1195 = vmatpush.msra.mxu0 0.0
        %1196 = vmatpush.msra.mxu0 0.0
        %1197 = vmatpush.msra.mxu0 0.0
        %1198 = vmatpush.msra.mxu0 %v945
        %1199 = vmatpush.msra.mxu0 %v944
        %1200 = vmatpush.msra.mxu0 %v943
        %1201 = vmatpush.msra.mxu0 %v942
        %1202 = vmatmul.f32.gmra.mxu0 %v1184
        %v1203 = vpop.f32.mrf.mxu0
        %v1204 = vadd.f32 0.0, %v1203
        %1205 = vdwg.mxu0
        %v1207 = vrot.slane %v1204, 5
        %v1209 = vadd.f32 %v941, %v1207
        %v1210 = vxor.u32 %v1209, 2147483648
        %v1211 = vmul.f32 %v1210, 1.442695
        %v1212 = vpow.pop %v1211
        %v1213 = vadd.f32 %v1212, 1.0
        %v1214 = vrcp.pop %v1213
        %v1215 = vmul.f32 %v1213, %v1214
        %v1216 = vsub.f32 1.0, %v1215
        %v1217 = vmul.f32 %v1214, %v1216
        %v1218 = vadd.f32 %v1214, %v1217
        %vm1219 = vweird.f32 %v1213
        %vm1220 = vweird.f32 %v1214
        %vm1221 = vmor %vm1219, %vm1220
        %v1222 = vsel %vm1221, %v1214, %v1218
        %v1223 = vand.u32 2147483647, %v1213
        %vm1224 = vcmp.eq.f32.partialorder %v1223, 8.507059e+37
        %v1225 = vand.u32 %v1213, 2147483648
        %v1226 = vor.u32 1.1754944e-38, %v1225
        %v1227 = vsel %vm1224, %v1226, %v1222
        %v1228 = vmul.f32 1.0, %v1227
        %v1229 = vtanh.pop %v1209
        %v1231 = vrot.slane %v1164, 7
        %v1233 = vmul.f32 %v1228, %v1231
        %1235 = vrot.lane.b32.xlu0 %v1229, 64
        %v1236 = vpop.permute.xlu0 %1235
        %v1238 = vmul.f32 %v1228, %v1236
        %1240 = vrot.lane.b32.xlu0 %v1238, 32
        %v1241 = vpop.permute.xlu0 %1240
        %v1243 = vadd.f32 %v1233, %v1241
        %v1244 = vtanh.pop %v1243
        %1246 = vrot.lane.b32.xlu0 %v1244, 64
        %v1247 = vpop.permute.xlu0 %1246
        %v1249 = vmul.f32 %v1228, %v1247
        %v1250 = vmul.f32 %v1249, %v1012
        %1252 = vrot.lane.b32.xlu0 %v1250, 32
        %v1253 = vpop.permute.xlu0 %1252
        %vm1255 = vcmask 257027
        %v1256 = vsel %vm1255, %v1253, 0.0
        %1257 = vadd.xlane.f32.xlu0 %v1256
        %v1258 = vpop.xlane.xlu0 %1257
        %v1260 = vrot.slane %v1249, 3
        %1261 = vrot.lane.b32.xlu0 %v1260, 32
        %v1262 = vpop.permute.xlu0 %1261
        %v1263 = vsel %vm947, %v1262, 0
        %1265 = vmatpush.msra.mxu0 0.0
        %1266 = vmatpush.msra.mxu0 0.0
        %1267 = vmatpush.msra.mxu0 0.0
        %1268 = vmatpush.msra.mxu0 0.0
        %1269 = vmatpush.msra.mxu0 0.0
        %1270 = vmatpush.msra.mxu0 0.0
        %1271 = vmatpush.msra.mxu0 0.0
        %1272 = vmatpush.msra.mxu0 0.0
        %1273 = vmatpush.msra.mxu0 0.0
        %1274 = vmatpush.msra.mxu0 0.0
        %1275 = vmatpush.msra.mxu0 0.0
        %1276 = vmatpush.msra.mxu0 0.0
        %1277 = vmatpush.msra.mxu0 %v945
        %1278 = vmatpush.msra.mxu0 %v944
        %1279 = vmatpush.msra.mxu0 %v943
        %1280 = vmatpush.msra.mxu0 %v942
        %1281 = vmatmul.f32.gmra.mxu0 %v1263
        %v1282 = vpop.f32.mrf.mxu0
        %v1283 = vadd.f32 0.0, %v1282
        %1284 = vdwg.mxu0
        %v1286 = vrot.slane %v1283, 4
        %v1288 = vadd.f32 %v941, %v1286
        %v1289 = vxor.u32 %v1288, 2147483648
        %v1290 = vmul.f32 %v1289, 1.442695
        %v1291 = vpow.pop %v1290
        %v1292 = vadd.f32 %v1291, 1.0
        %v1293 = vrcp.pop %v1292
        %v1294 = vmul.f32 %v1292, %v1293
        %v1295 = vsub.f32 1.0, %v1294
        %v1296 = vmul.f32 %v1293, %v1295
        %v1297 = vadd.f32 %v1293, %v1296
        %vm1298 = vweird.f32 %v1292
        %vm1299 = vweird.f32 %v1293
        %vm1300 = vmor %vm1298, %vm1299
        %v1301 = vsel %vm1300, %v1293, %v1297
        %v1302 = vand.u32 2147483647, %v1292
        %vm1303 = vcmp.eq.f32.partialorder %v1302, 8.507059e+37
        %v1304 = vand.u32 %v1292, 2147483648
        %v1305 = vor.u32 1.1754944e-38, %v1304
        %v1306 = vsel %vm1303, %v1305, %v1301
        %v1307 = vmul.f32 1.0, %v1306
        %v1308 = vtanh.pop %v1288
        %v1310 = vrot.slane %v1243, 7
        %v1312 = vmul.f32 %v1307, %v1310
        %1314 = vrot.lane.b32.xlu0 %v1308, 64
        %v1315 = vpop.permute.xlu0 %1314
        %v1317 = vmul.f32 %v1307, %v1315
        %1319 = vrot.lane.b32.xlu0 %v1317, 32
        %v1320 = vpop.permute.xlu0 %1319
        %v1322 = vadd.f32 %v1312, %v1320
        %v1323 = vtanh.pop %v1322
        %1325 = vrot.lane.b32.xlu0 %v1323, 64
        %v1326 = vpop.permute.xlu0 %1325
        %v1328 = vmul.f32 %v1307, %v1326
        %v1329 = vmul.f32 %v1328, %v1012
        %1331 = vrot.lane.b32.xlu0 %v1329, 32
        %v1332 = vpop.permute.xlu0 %1331
        %vm1334 = vcmask 258052
        %v1335 = vsel %vm1334, %v1332, 0.0
        %1336 = vadd.xlane.f32.xlu0 %v1335
        %v1337 = vpop.xlane.xlu0 %1336
        %v1339 = vrot.slane %v1328, 4
        %1340 = vrot.lane.b32.xlu0 %v1339, 32
        %v1341 = vpop.permute.xlu0 %1340
        %v1342 = vsel %vm947, %v1341, 0
        %1344 = vmatpush.msra.mxu0 0.0
        %1345 = vmatpush.msra.mxu0 0.0
        %1346 = vmatpush.msra.mxu0 0.0
        %1347 = vmatpush.msra.mxu0 0.0
        %1348 = vmatpush.msra.mxu0 0.0
        %1349 = vmatpush.msra.mxu0 0.0
        %1350 = vmatpush.msra.mxu0 0.0
        %1351 = vmatpush.msra.mxu0 0.0
        %1352 = vmatpush.msra.mxu0 0.0
        %1353 = vmatpush.msra.mxu0 0.0
        %1354 = vmatpush.msra.mxu0 0.0
        %1355 = vmatpush.msra.mxu0 0.0
        %1356 = vmatpush.msra.mxu0 %v945
        %1357 = vmatpush.msra.mxu0 %v944
        %1358 = vmatpush.msra.mxu0 %v943
        %1359 = vmatpush.msra.mxu0 %v942
        %1360 = vmatmul.f32.gmra.mxu0 %v1342
        %v1361 = vpop.f32.mrf.mxu0
        %v1362 = vadd.f32 0.0, %v1361
        %1363 = vdwg.mxu0
        %v1365 = vrot.slane %v1362, 3
        %v1367 = vadd.f32 %v941, %v1365
        %v1368 = vxor.u32 %v1367, 2147483648
        %v1369 = vmul.f32 %v1368, 1.442695
        %v1370 = vpow.pop %v1369
        %v1371 = vadd.f32 %v1370, 1.0
        %v1372 = vrcp.pop %v1371
        %v1373 = vmul.f32 %v1371, %v1372
        %v1374 = vsub.f32 1.0, %v1373
        %v1375 = vmul.f32 %v1372, %v1374
        %v1376 = vadd.f32 %v1372, %v1375
        %vm1377 = vweird.f32 %v1371
        %vm1378 = vweird.f32 %v1372
        %vm1379 = vmor %vm1377, %vm1378
        %v1380 = vsel %vm1379, %v1372, %v1376
        %v1381 = vand.u32 2147483647, %v1371
        %vm1382 = vcmp.eq.f32.partialorder %v1381, 8.507059e+37
        %v1383 = vand.u32 %v1371, 2147483648
        %v1384 = vor.u32 1.1754944e-38, %v1383
        %v1385 = vsel %vm1382, %v1384, %v1380
        %v1386 = vmul.f32 1.0, %v1385
        %v1387 = vtanh.pop %v1367
        %v1389 = vrot.slane %v1322, 7
        %v1391 = vmul.f32 %v1386, %v1389
        %1393 = vrot.lane.b32.xlu0 %v1387, 64
        %v1394 = vpop.permute.xlu0 %1393
        %v1396 = vmul.f32 %v1386, %v1394
        %1398 = vrot.lane.b32.xlu0 %v1396, 32
        %v1399 = vpop.permute.xlu0 %1398
        %v1401 = vadd.f32 %v1391, %v1399
        %v1402 = vtanh.pop %v1401
        %1404 = vrot.lane.b32.xlu0 %v1402, 64
        %v1405 = vpop.permute.xlu0 %1404
        %v1407 = vmul.f32 %v1386, %v1405
        %v1408 = vmul.f32 %v1407, %v1012
        %1410 = vrot.lane.b32.xlu0 %v1408, 32
        %v1411 = vpop.permute.xlu0 %1410
        %vm1413 = vcmask 259077
        %v1414 = vsel %vm1413, %v1411, 0.0
        %1415 = vadd.xlane.f32.xlu0 %v1414
        %v1416 = vpop.xlane.xlu0 %1415
        %v1418 = vrot.slane %v1407, 5
        %1419 = vrot.lane.b32.xlu0 %v1418, 32
        %v1420 = vpop.permute.xlu0 %1419
        %v1421 = vsel %vm947, %v1420, 0
        %1423 = vmatpush.msra.mxu0 0.0
        %1424 = vmatpush.msra.mxu0 0.0
        %1425 = vmatpush.msra.mxu0 0.0
        %1426 = vmatpush.msra.mxu0 0.0
        %1427 = vmatpush.msra.mxu0 0.0
        %1428 = vmatpush.msra.mxu0 0.0
        %1429 = vmatpush.msra.mxu0 0.0
        %1430 = vmatpush.msra.mxu0 0.0
        %1431 = vmatpush.msra.mxu0 0.0
        %1432 = vmatpush.msra.mxu0 0.0
        %1433 = vmatpush.msra.mxu0 0.0
        %1434 = vmatpush.msra.mxu0 0.0
        %1435 = vmatpush.msra.mxu0 %v945
        %1436 = vmatpush.msra.mxu0 %v944
        %1437 = vmatpush.msra.mxu0 %v943
        %1438 = vmatpush.msra.mxu0 %v942
        %1439 = vmatmul.f32.gmra.mxu0 %v1421
        %v1440 = vpop.f32.mrf.mxu0
        %v1441 = vadd.f32 0.0, %v1440
        %1442 = vdwg.mxu0
        %v1444 = vrot.slane %v1441, 2
        %v1446 = vadd.f32 %v941, %v1444
        %v1447 = vxor.u32 %v1446, 2147483648
        %v1448 = vmul.f32 %v1447, 1.442695
        %v1449 = vpow.pop %v1448
        %v1450 = vadd.f32 %v1449, 1.0
        %v1451 = vrcp.pop %v1450
        %v1452 = vmul.f32 %v1450, %v1451
        %v1453 = vsub.f32 1.0, %v1452
        %v1454 = vmul.f32 %v1451, %v1453
        %v1455 = vadd.f32 %v1451, %v1454
        %vm1456 = vweird.f32 %v1450
        %vm1457 = vweird.f32 %v1451
        %vm1458 = vmor %vm1456, %vm1457
        %v1459 = vsel %vm1458, %v1451, %v1455
        %v1460 = vand.u32 2147483647, %v1450
        %vm1461 = vcmp.eq.f32.partialorder %v1460, 8.507059e+37
        %v1462 = vand.u32 %v1450, 2147483648
        %v1463 = vor.u32 1.1754944e-38, %v1462
        %v1464 = vsel %vm1461, %v1463, %v1459
        %v1465 = vmul.f32 1.0, %v1464
        %v1466 = vtanh.pop %v1446
        %v1468 = vrot.slane %v1401, 7
        %v1470 = vmul.f32 %v1465, %v1468
        %1472 = vrot.lane.b32.xlu0 %v1466, 64
        %v1473 = vpop.permute.xlu0 %1472
        %v1475 = vmul.f32 %v1465, %v1473
        %1477 = vrot.lane.b32.xlu0 %v1475, 32
        %v1478 = vpop.permute.xlu0 %1477
        %v1480 = vadd.f32 %v1470, %v1478
        %v1481 = vtanh.pop %v1480
        %1483 = vrot.lane.b32.xlu0 %v1481, 64
        %v1484 = vpop.permute.xlu0 %1483
        %v1486 = vmul.f32 %v1465, %v1484
        %v1487 = vmul.f32 %v1486, %v1012
        %1489 = vrot.lane.b32.xlu0 %v1487, 32
        %v1490 = vpop.permute.xlu0 %1489
        %vm1492 = vcmask 260102
        %v1493 = vsel %vm1492, %v1490, 0.0
        %1494 = vadd.xlane.f32.xlu0 %v1493
        %v1495 = vpop.xlane.xlu0 %1494
        %v1497 = vrot.slane %v1486, 6
        %1498 = vrot.lane.b32.xlu0 %v1497, 32
        %v1499 = vpop.permute.xlu0 %1498
        %v1500 = vsel %vm947, %v1499, 0
        %1502 = vmatpush.msra.mxu0 0.0
        %1503 = vmatpush.msra.mxu0 0.0
        %1504 = vmatpush.msra.mxu0 0.0
        %1505 = vmatpush.msra.mxu0 0.0
        %1506 = vmatpush.msra.mxu0 0.0
        %1507 = vmatpush.msra.mxu0 0.0
        %1508 = vmatpush.msra.mxu0 0.0
        %1509 = vmatpush.msra.mxu0 0.0
        %1510 = vmatpush.msra.mxu0 0.0
        %1511 = vmatpush.msra.mxu0 0.0
        %1512 = vmatpush.msra.mxu0 0.0
        %1513 = vmatpush.msra.mxu0 0.0
        %1514 = vmatpush.msra.mxu0 %v945
        %1515 = vmatpush.msra.mxu0 %v944
        %1516 = vmatpush.msra.mxu0 %v943
        %1517 = vmatpush.msra.mxu0 %v942
        %1518 = vmatmul.f32.gmra.mxu0 %v1500
        %v1519 = vpop.f32.mrf.mxu0
        %v1520 = vadd.f32 0.0, %v1519
        %1521 = vdwg.mxu0
        %v1523 = vrot.slane %v1520, 1
        %v1525 = vadd.f32 %v941, %v1523
        %v1526 = vxor.u32 %v1525, 2147483648
        %v1527 = vmul.f32 %v1526, 1.442695
        %v1528 = vpow.pop %v1527
        %v1529 = vadd.f32 %v1528, 1.0
        %v1530 = vrcp.pop %v1529
        %v1531 = vmul.f32 %v1529, %v1530
        %v1532 = vsub.f32 1.0, %v1531
        %v1533 = vmul.f32 %v1530, %v1532
        %v1534 = vadd.f32 %v1530, %v1533
        %vm1535 = vweird.f32 %v1529
        %vm1536 = vweird.f32 %v1530
        %vm1537 = vmor %vm1535, %vm1536
        %v1538 = vsel %vm1537, %v1530, %v1534
        %v1539 = vand.u32 2147483647, %v1529
        %vm1540 = vcmp.eq.f32.partialorder %v1539, 8.507059e+37
        %v1541 = vand.u32 %v1529, 2147483648
        %v1542 = vor.u32 1.1754944e-38, %v1541
        %v1543 = vsel %vm1540, %v1542, %v1538
        %v1544 = vmul.f32 1.0, %v1543
        %v1545 = vtanh.pop %v1525
        %v1547 = vrot.slane %v1480, 7
        %v1549 = vmul.f32 %v1544, %v1547
        %1551 = vrot.lane.b32.xlu0 %v1545, 64
        %v1552 = vpop.permute.xlu0 %1551
        %v1554 = vmul.f32 %v1544, %v1552
        %1556 = vrot.lane.b32.xlu0 %v1554, 32
        %v1557 = vpop.permute.xlu0 %1556
        %v1559 = vadd.f32 %v1549, %v1557
        %v1560 = vtanh.pop %v1559
        %1562 = vrot.lane.b32.xlu0 %v1560, 64
        %v1563 = vpop.permute.xlu0 %1562
        %v1565 = vmul.f32 %v1544, %v1563
        %v1566 = vmul.f32 %v1565, %v1012
        %1568 = vrot.lane.b32.xlu0 %v1566, 32
        %v1569 = vpop.permute.xlu0 %1568
        %vm1571 = vcmask 261127
        %v1572 = vsel %vm1571, %v1569, 0.0
        %1573 = vadd.xlane.f32.xlu0 %v1572
        %v1574 = vpop.xlane.xlu0 %1573
        %v1576 = vrot.slane %v1100, 1
        %v1579 = vrot.slane %v1179, 2
        %v1582 = vrot.slane %v1258, 3
        %v1585 = vrot.slane %v1337, 4
        %v1588 = vrot.slane %v1416, 5
        %v1591 = vrot.slane %v1495, 6
        %v1594 = vrot.slane %v1574, 7
        %vm1596 = vcmask 7168
        %v1597 = vsel %vm1596, %v1022, %v1576
        %vm1598 = vcmask 15360
        %v1599 = vsel %vm1598, %v1597, %v1579
        %vm1600 = vcmask 23552
        %v1601 = vsel %vm1600, %v1599, %v1582
        %vm1602 = vcmask 31744
        %v1603 = vsel %vm1602, %v1601, %v1585
        %vm1604 = vcmask 39936
        %v1605 = vsel %vm1604, %v1603, %v1588
        %vm1606 = vcmask 48128
        %v1607 = vsel %vm1606, %v1605, %v1591
        %vm1608 = vcmask 56320
        %v1609 = vsel %vm1608, %v1607, %v1594
        %v1610 = vld [vmem:[#allocation2] sm:$0x1]
        %1612 = vset.pattern.permute.xlu0 0
        %1613 = vperm.xlu0 %1612, %v1610
        %v1614 = vpop.permute.xlu0 %1613
        %v1616 = vperm.slane %v1614, 0
        %v1617 = vadd.f32 %v1609, %v1616
        %vm1618 = vcmask 57344
        %1619 = vst.msk [vmem:[%s299] sm:$0x1] %vm1618, %v1617
        %s1620 = sand.u32 %s205, 1
        %s1621 = scalar_lea.sflag [#allocation4], %s1620
        %s1622 = sand.u32 %s205, 1
        %s1623 = scalar_lea.vmem [#allocation3], %s1622
        // Predicated region
        $region53: #{cnn_lstm_critic_forward.1} parent=51 // pred_check
          %p1624 = pneg %p215
        $region54: #{cnn_lstm_critic_forward.1} parent=51 // pred_check_branch
          %1626 = sbr.rel (%p1624) target = $region56
        $region55: #{cnn_lstm_critic_forward.1} parent=51 // pred_region
          %1628 = vsyncadd %s1621, 0
          %s1629 = scalar_lea.hbm %s8, %s24
          %s1631 = sshll.u32 %s1623, 4
          %s1632 = int_to_ptr.vmem [resolvable:$true] %s1631
          %s1633 = sshll.u32 %s1629, 4
          %s1634 = int_to_ptr.hbm [resolvable:$true] %s1633
          %1636 = dma.vmem_to_hbm [thread:$0]  %s1632, 16, %s1634, %s1621
        $region56: #{cnn_lstm_critic_forward.1} parent=51 // pred_fallthru
          _
      $region52: #{cnn_lstm_critic_forward.1} parent=5 // pred_fallthru
        _
      %p1637 = scmp.le.s32.totalorder 2, %s19
      // Predicated region
      $region57: #{cnn_lstm_critic_forward.1} parent=5 // pred_check
        %p1638 = pneg %p1637
      $region58: #{cnn_lstm_critic_forward.1} parent=5 // pred_check_branch
        %1640 = sbr.rel (%p1638) target = $region60
      $region59: #{cnn_lstm_critic_forward.1} parent=5 // pred_region
        %s1641 = ssub.s32 %s19, 2
        // Predicated region
        $region61: #{cnn_lstm_critic_forward.1} parent=59 // pred_check
          %p1642 = pneg %p221
        $region62: #{cnn_lstm_critic_forward.1} parent=59 // pred_check_branch
          %1644 = sbr.rel (%p1642) target = $region64
        $region63: #{cnn_lstm_critic_forward.1} parent=59 // pred_region
          %s1645 = sand.u32 %s206, 1
          %s1646 = scalar_lea.sflag [#allocation4], %s1645
          %s1647 = sand.u32 %s206, 1
          %s1648 = scalar_lea.vmem [#allocation3], %s1647
          %1650 = dma.done %s1646, 16
        $region64: #{cnn_lstm_critic_forward.1} parent=59 // pred_fallthru
          _
      $region60: #{cnn_lstm_critic_forward.1} parent=5 // pred_fallthru
        _
    $region6: #{cnn_lstm_critic_forward.1} parent=1 // loop_footer
      %s23 = sadd.s32 1, %s19
    $region7: #{cnn_lstm_critic_forward.1} parent=1 // loop_footer_branch
      %18 = sbr.rel target = $region3
    $region8: #{cnn_lstm_critic_forward.1} parent=1 // loop_exit
      _
    %1651 = vsyncpa [#allocation4], 1
    %s1652 = scalar_lea.sflag [#allocation4], 1
    %1653 = vsyncpa %s1652, 1

</llo_original>
